<compile_context>
chip_gen: v7x
topology: tpu7x:2x2x1
jax: 0.10.0
libtpu: 0.0.40
codegen_flags: <defaults>
</compile_context>

<pallas_src>
import functools

import jax
import jax.numpy as jnp
from jax.experimental import pallas as pl
from jax.experimental.pallas import tpu as pltpu

EPS = 1e-6
NUM_GROUPS = 32  # Normalize() hardcodes num_groups=32


def _swish(v):
    return v * jax.nn.sigmoid(v)


def resnet_block_kernel(x_ref, tadd_ref,
                        g1_ref, b1_ref, gm1_ref, w1_ref, cb1_ref,
                        g2_ref, b2_ref, gm2_ref, w2_ref, cb2_ref,
                        nw_ref, nb_ref,
                        out_ref, *, length, inv_n1, inv_n2,
                        identity_g1, identity_g2, batch_block):
    # Hoisted lane-edge masks, shared by both convs and all batch elements.
    lane = jax.lax.broadcasted_iota(jnp.int32, (1, length), 1)
    is_first = lane == 0
    is_last = lane == (length - 1)

    def conv3(h, w_ref, bias):
        # Zero-padded 3-tap conv as ONE MXU matmul: stack the three lane-shifted
        # copies along sublanes -> (3*Cin, L); weight is (Cout, 3*Cin) tap-major.
        h_prev = jnp.where(is_first, 0.0, pltpu.roll(h, 1, axis=1))             # x[l-1]
        h_next = jnp.where(is_last, 0.0, pltpu.roll(h, length - 1, axis=1))     # x[l+1]
        h_stack = jnp.concatenate([h_prev, h, h_next], axis=0)
        return jnp.dot(w_ref[...], h_stack, preferred_element_type=jnp.float32) + bias

    def group_norm(h, gm_ref, gamma, beta, inv_n, identity):
        s = jnp.sum(h, axis=-1, keepdims=True)        # (C, 1) per-channel sum
        ss = jnp.sum(h * h, axis=-1, keepdims=True)   # (C, 1) per-channel sum of squares
        if identity:
            # group_size == 1: gmat is the identity -> skip the dot entirely.
            mean, ex2 = s * inv_n, ss * inv_n
        else:
            stats = jnp.concatenate([s, ss], axis=-1)                            # (C, 2)
            g = jnp.dot(gm_ref[...], stats, preferred_element_type=jnp.float32) * inv_n
            mean, ex2 = g[:, 0:1], g[:, 1:2]
        var = jnp.maximum(ex2 - mean * mean, 0.0)     # clamp f32 cancellation before rsqrt
        return (h - mean) * jax.lax.rsqrt(var + EPS) * gamma + beta

    for bb in range(batch_block):  # static, tiny (1 on v7x, B on single-TC chips)
        x = x_ref[bb]                                                   # (Cin, L)

        # norm1 + swish + conv1 (k=3, stride=1, pad=1)
        h = _swish(group_norm(x, gm1_ref, g1_ref[...], b1_ref[...], inv_n1, identity_g1))
        h = conv3(h, w1_ref, cb1_ref[...])

        # temb path: projection precomputed in the wrapper (removes an N=1 MXU dot).
        # TODO(synk): the PyTorch reference indexes [:, :, None, None] on a 3-D Conv1d
        # output (shape-incompatible in general); we use the intended per-channel broadcast.
        h = h + tadd_ref[bb]

        # norm2 + swish
        h = _swish(group_norm(h, gm2_ref, g2_ref[...], b2_ref[...], inv_n2, identity_g2))
        # dropout: identity (eval-mode forward)

        # conv2 (k=3, stride=1, pad=1)
        h = conv3(h, w2_ref, cb2_ref[...])

        # nin_shortcut (1x1 conv): in_channels != out_channels, conv_shortcut=False
        x_sc = jnp.dot(nw_ref[...], x, preferred_element_type=jnp.float32) + nb_ref[...]
        out_ref[bb] = x_sc + h


def _default_batch_block(B):
    # v7x has 2 TensorCores/chip: keep the batch grid parallel across them.
    # Single-TC chips (v5e/v6e): collapse the batch into one grid step.
    try:
        kind = jax.devices()[0].device_kind.lower()
    except Exception:
        return 1
    if "v7" in kind or "7x" in kind:
        return 1 if B % 2 == 0 else B
    return B


def resnet_block_1d(x, temb, params, batch_block=None):
    B, Cin, L = x.shape
    Cout = params["conv1_w"].shape[0]
    assert Cin % NUM_GROUPS == 0 and Cout % NUM_GROUPS == 0
    if batch_block is None:
        batch_block = _default_batch_block(B)
    assert B % batch_block == 0
    # TODO(synk): for production audio shapes on v7x (64 MiB VMEM), chunk L into
    # 1024-2048-lane tiles with a k=3 halo in the index_map and set vmem_limit_bytes.

    def gmat(c):
        grp = jnp.arange(c) // (c // NUM_GROUPS)
        return (grp[:, None] == grp[None, :]).astype(jnp.float32)

    def conv_w(w):  # (Cout, Cin, 3) -> (Cout, 3*Cin), tap-major contraction axis
        return jnp.transpose(w, (0, 2, 1)).reshape(w.shape[0], 3 * w.shape[1])

    col = lambda v: v.reshape(-1, 1)

    # temb projection hoisted out of the kernel (tiny XLA pre-op, off the MXU path).
    tadd = (_swish(temb) @ params["temb_w"].T + params["temb_b"]).reshape(B, Cout, 1)

    inputs = (
        x, tadd,
        col(params["norm1_g"]), col(params["norm1_b"]), gmat(Cin),
        conv_w(params["conv1_w"]), col(params["conv1_b"]),
        col(params["norm2_g"]), col(params["norm2_b"]), gmat(Cout),
        conv_w(params["conv2_w"]), col(params["conv2_b"]),
        params["nin_w"], col(params["nin_b"]),
    )

    def full_spec(a):
        zeros = (0,) * a.ndim
        return pl.BlockSpec(a.shape, lambda g, _z=zeros: _z)

    in_specs = [
        pl.BlockSpec((batch_block, Cin, L), lambda g: (g, 0, 0)),
        pl.BlockSpec((batch_block, Cout, 1), lambda g: (g, 0, 0)),
    ] + [full_spec(a) for a in inputs[2:]]

    kernel = functools.partial(
        resnet_block_kernel,
        length=L,
        inv_n1=1.0 / ((Cin // NUM_GROUPS) * L),
        inv_n2=1.0 / ((Cout // NUM_GROUPS) * L),
        identity_g1=(Cin == NUM_GROUPS),
        identity_g2=(Cout == NUM_GROUPS),
        batch_block=batch_block,
    )

    return pl.pallas_call(
        kernel,
        out_shape=jax.ShapeDtypeStruct((B, Cout, L), jnp.float32),
        grid=(B // batch_block,),
        in_specs=in_specs,
        out_specs=pl.BlockSpec((batch_block, Cout, L), lambda g: (g, 0, 0)),
        compiler_params=pltpu.CompilerParams(dimension_semantics=("parallel",)),
    )(*inputs)


def ref_forward(x, temb, p):
    """Pure-JAX reference mirroring the PyTorch forward (eval mode)."""
    def gn(h, gamma, beta):
        b, c, l = h.shape
        hg = h.reshape(b, NUM_GROUPS, (c // NUM_GROUPS) * l)
        mean = hg.mean(-1, keepdims=True)
        var = hg.var(-1, keepdims=True)
        hn = ((hg - mean) / jnp.sqrt(var + EPS)).reshape(b, c, l)
        return hn * gamma[None, :, None] + beta[None, :, None]

    def conv1d(h, w, bias, pad):
        out = jax.lax.conv_general_dilated(
            h, w, window_strides=(1,), padding=[(pad, pad)],
            dimension_numbers=("NCH", "OIH", "NCH"))
        return out + bias[None, :, None]

    sw = lambda v: v * jax.nn.sigmoid(v)
    h = sw(gn(x, p["norm1_g"], p["norm1_b"]))
    h = conv1d(h, p["conv1_w"], p["conv1_b"], 1)
    h = h + (sw(temb) @ p["temb_w"].T + p["temb_b"])[:, :, None]
    h = sw(gn(h, p["norm2_g"], p["norm2_b"]))
    h = conv1d(h, p["conv2_w"], p["conv2_b"], 1)
    xs = conv1d(x, p["nin_w"][:, :, None], p["nin_b"], 0)
    return xs + h


if __name__ == "__main__":
    # Small shapes consistent with the module: GroupNorm(32 groups) forces
    # channels to be multiples of 32; L=128 aligns with the lane width.
    B, Cin, Cout, L, T = 2, 32, 64, 128, 64
    f32 = jnp.float32
    key = jax.random.PRNGKey(0)
    ks = jax.random.split(key, 12)

    params = {
        "norm1_g": jnp.ones((Cin,), f32),                                   # GroupNorm affine init
        "norm1_b": jnp.zeros((Cin,), f32),
        "conv1_w": 0.05 * jax.random.normal(ks[0], (Cout, Cin, 3), f32),
        "conv1_b": 0.05 * jax.random.normal(ks[1], (Cout,), f32),
        "temb_w": 0.05 * jax.random.normal(ks[2], (Cout, T), f32),
        "temb_b": 0.05 * jax.random.normal(ks[3], (Cout,), f32),
        "norm2_g": jnp.ones((Cout,), f32) + 0.1 * jax.random.normal(ks[4], (Cout,), f32),
        "norm2_b": 0.1 * jax.random.normal(ks[5], (Cout,), f32),
        "conv2_w": 0.05 * jax.random.normal(ks[6], (Cout, Cout, 3), f32),
        "conv2_b": 0.05 * jax.random.normal(ks[7], (Cout,), f32),
        "nin_w": 0.05 * jax.random.normal(ks[8], (Cout, Cin), f32),
        "nin_b": 0.05 * jax.random.normal(ks[9], (Cout,), f32),
    }
    x = jax.random.normal(ks[10], (B, Cin, L), f32)
    temb = jax.random.normal(ks[11], (B, T), f32)

    out = jax.block_until_ready(resnet_block_1d(x, temb, params))
    ref = ref_forward(x, temb, params)

    assert out.shape == (B, Cout, L)
    max_err = float(jnp.max(jnp.abs(out - ref)))
    # Loose tolerance: accommodates reduced-precision conv paths on either side;
    # structural bugs would produce O(1) errors.
    if max_err > 5e-2:
        raise AssertionError(f"Pallas/ref mismatch: max abs err = {max_err}")
    print("KERNEL_OK")
</pallas_src>

<mosaic_0001>
module attributes {stable_mosaic.version = 11 : i64} {
  func.func @resnet_block_kernel(%arg0: i32, %arg1: memref<2x32x128xf32, #tpu.memory_space<vmem>>, %arg2: memref<2x64x1xf32, #tpu.memory_space<vmem>>, %arg3: memref<32x1xf32, #tpu.memory_space<vmem>>, %arg4: memref<32x1xf32, #tpu.memory_space<vmem>>, %arg5: memref<32x32xf32, #tpu.memory_space<vmem>>, %arg6: memref<64x96xf32, #tpu.memory_space<vmem>>, %arg7: memref<64x1xf32, #tpu.memory_space<vmem>>, %arg8: memref<64x1xf32, #tpu.memory_space<vmem>>, %arg9: memref<64x1xf32, #tpu.memory_space<vmem>>, %arg10: memref<64x64xf32, #tpu.memory_space<vmem>>, %arg11: memref<64x192xf32, #tpu.memory_space<vmem>>, %arg12: memref<64x1xf32, #tpu.memory_space<vmem>>, %arg13: memref<64x32xf32, #tpu.memory_space<vmem>>, %arg14: memref<64x1xf32, #tpu.memory_space<vmem>>, %arg15: memref<2x64x128xf32, #tpu.memory_space<vmem>>) attributes {dimension_semantics = [#tpu.dimension_semantics<parallel>], iteration_bounds = array<i64: 1>, scalar_prefetch = 0 : i64, scratch_operands = 0 : i64, tpu.core_type = #tpu.core_type<tc>, window_params = [{transform_indices = @transform_0, window_bounds = array<i64: 2, 32, 128>}, {transform_indices = @transform_1, window_bounds = array<i64: 2, 64, 1>}, {pipeline_mode = #tpu.pipeline_mode<synchronous>, transform_indices = @transform_2, window_bounds = array<i64: 32, 1>}, {pipeline_mode = #tpu.pipeline_mode<synchronous>, transform_indices = @transform_3, window_bounds = array<i64: 32, 1>}, {pipeline_mode = #tpu.pipeline_mode<synchronous>, transform_indices = @transform_4, window_bounds = array<i64: 32, 32>}, {pipeline_mode = #tpu.pipeline_mode<synchronous>, transform_indices = @transform_5, window_bounds = array<i64: 64, 96>}, {pipeline_mode = #tpu.pipeline_mode<synchronous>, transform_indices = @transform_6, window_bounds = array<i64: 64, 1>}, {pipeline_mode = #tpu.pipeline_mode<synchronous>, transform_indices = @transform_7, window_bounds = array<i64: 64, 1>}, {pipeline_mode = #tpu.pipeline_mode<synchronous>, transform_indices = @transform_8, window_bounds = array<i64: 64, 1>}, {pipeline_mode = #tpu.pipeline_mode<synchronous>, transform_indices = @transform_9, window_bounds = array<i64: 64, 64>}, {pipeline_mode = #tpu.pipeline_mode<synchronous>, transform_indices = @transform_10, window_bounds = array<i64: 64, 192>}, {pipeline_mode = #tpu.pipeline_mode<synchronous>, transform_indices = @transform_11, window_bounds = array<i64: 64, 1>}, {pipeline_mode = #tpu.pipeline_mode<synchronous>, transform_indices = @transform_12, window_bounds = array<i64: 64, 32>}, {pipeline_mode = #tpu.pipeline_mode<synchronous>, transform_indices = @transform_13, window_bounds = array<i64: 64, 1>}, {transform_indices = @transform_14, window_bounds = array<i64: 2, 64, 128>}]} {
    %0 = tpu.iota {dimensions = array<i32: 1>} : vector<1x128xi32>
    %c0_i32 = arith.constant 0 : i32
    %1 = vector.broadcast %c0_i32 : i32 to vector<1x128xi32>
    %2 = arith.cmpi eq, %0, %1 : vector<1x128xi32>
    %c127_i32 = arith.constant 127 : i32
    %3 = vector.broadcast %c127_i32 : i32 to vector<1x128xi32>
    %4 = arith.cmpi eq, %0, %3 : vector<1x128xi32>
    %c0 = arith.constant 0 : index
    %c0_0 = arith.constant 0 : index
    %c0_1 = arith.constant 0 : index
    %5 = vector.load %arg1[%c0, %c0_0, %c0_1] : memref<2x32x128xf32, #tpu.memory_space<vmem>>, vector<1x32x128xf32>
    %6 = vector.shape_cast %5 : vector<1x32x128xf32> to vector<32x128xf32>
    %c0_2 = arith.constant 0 : index
    %c0_3 = arith.constant 0 : index
    %7 = vector.load %arg3[%c0_2, %c0_3] : memref<32x1xf32, #tpu.memory_space<vmem>>, vector<32x1xf32>
    %c0_4 = arith.constant 0 : index
    %c0_5 = arith.constant 0 : index
    %8 = vector.load %arg4[%c0_4, %c0_5] : memref<32x1xf32, #tpu.memory_space<vmem>>, vector<32x1xf32>
    %cst = arith.constant dense<0.000000e+00> : vector<32xf32>
    %9 = vector.multi_reduction <add>, %6, %cst [1] : vector<32x128xf32> to vector<32xf32>
    %10 = vector.shape_cast %9 : vector<32xf32> to vector<32x1xf32>
    %11 = arith.mulf %6, %6 : vector<32x128xf32>
    %cst_6 = arith.constant dense<0.000000e+00> : vector<32xf32>
    %12 = vector.multi_reduction <add>, %11, %cst_6 [1] : vector<32x128xf32> to vector<32xf32>
    %13 = vector.shape_cast %12 : vector<32xf32> to vector<32x1xf32>
    %cst_7 = arith.constant 7.812500e-03 : f32
    %14 = vector.broadcast %cst_7 : f32 to vector<32x1xf32>
    %15 = arith.mulf %10, %14 : vector<32x1xf32>
    %cst_8 = arith.constant 7.812500e-03 : f32
    %16 = vector.broadcast %cst_8 : f32 to vector<32x1xf32>
    %17 = arith.mulf %13, %16 : vector<32x1xf32>
    %18 = arith.mulf %15, %15 : vector<32x1xf32>
    %19 = arith.subf %17, %18 : vector<32x1xf32>
    %cst_9 = arith.constant 0.000000e+00 : f32
    %20 = vector.broadcast %cst_9 : f32 to vector<32x1xf32>
    %21 = arith.maximumf %19, %20 : vector<32x1xf32>
    %22 = vector.broadcast %15 : vector<32x1xf32> to vector<32x128xf32>
    %23 = arith.subf %6, %22 : vector<32x128xf32>
    %cst_10 = arith.constant 9.99999997E-7 : f32
    %24 = vector.broadcast %cst_10 : f32 to vector<32x1xf32>
    %25 = arith.addf %21, %24 : vector<32x1xf32>
    %26 = math.rsqrt %25 : vector<32x1xf32>
    %27 = vector.broadcast %26 : vector<32x1xf32> to vector<32x128xf32>
    %28 = arith.mulf %23, %27 : vector<32x128xf32>
    %29 = vector.broadcast %7 : vector<32x1xf32> to vector<32x128xf32>
    %30 = arith.mulf %28, %29 : vector<32x128xf32>
    %31 = vector.broadcast %8 : vector<32x1xf32> to vector<32x128xf32>
    %32 = arith.addf %30, %31 : vector<32x128xf32>
    %33 = arith.negf %32 : vector<32x128xf32>
    %34 = math.exp %33 : vector<32x128xf32>
    %cst_11 = arith.constant 1.000000e+00 : f32
    %35 = vector.broadcast %cst_11 : f32 to vector<32x128xf32>
    %36 = arith.addf %35, %34 : vector<32x128xf32>
    %37 = arith.divf %35, %36 : vector<32x128xf32>
    %38 = arith.mulf %32, %37 : vector<32x128xf32>
    %c0_12 = arith.constant 0 : index
    %c0_13 = arith.constant 0 : index
    %39 = vector.load %arg7[%c0_12, %c0_13] : memref<64x1xf32, #tpu.memory_space<vmem>>, vector<64x1xf32>
    %c1_i32 = arith.constant 1 : i32
    %40 = tpu.dynamic_rotate %38 by %c1_i32 dim 1 : vector<32x128xf32>, i32 -> vector<32x128xf32>
    %cst_14 = arith.constant 0.000000e+00 : f32
    %41 = vector.shape_cast %2 : vector<1x128xi1> to vector<1x128xi1>
    %42 = vector.broadcast %41 : vector<1x128xi1> to vector<32x128xi1>
    %43 = vector.broadcast %cst_14 : f32 to vector<32x128xf32>
    %44 = arith.select %42, %43, %40 : vector<32x128xi1>, vector<32x128xf32>
    %c127_i32_15 = arith.constant 127 : i32
    %45 = tpu.dynamic_rotate %38 by %c127_i32_15 dim 1 : vector<32x128xf32>, i32 -> vector<32x128xf32>
    %cst_16 = arith.constant 0.000000e+00 : f32
    %46 = vector.shape_cast %4 : vector<1x128xi1> to vector<1x128xi1>
    %47 = vector.broadcast %46 : vector<1x128xi1> to vector<32x128xi1>
    %48 = vector.broadcast %cst_16 : f32 to vector<32x128xf32>
    %49 = arith.select %47, %48, %45 : vector<32x128xi1>, vector<32x128xf32>
    %50 = tpu.concatenate %44, %38, %49 in 0 : vector<32x128xf32>, vector<32x128xf32>, vector<32x128xf32> -> vector<96x128xf32>
    %c0_17 = arith.constant 0 : index
    %c0_18 = arith.constant 0 : index
    %51 = vector.load %arg6[%c0_17, %c0_18] : memref<64x96xf32, #tpu.memory_space<vmem>>, vector<64x96xf32>
    %cst_19 = arith.constant dense<0.000000e+00> : vector<64x128xf32>
    %52 = tpu.matmul %51, %50, %cst_19 {dimension_numbers = #tpu.dot_dimension_numbers<[1], [0], [0], [1], [0, 0, 1, 1], [], []>} : vector<64x96xf32>, vector<96x128xf32>, vector<64x128xf32> -> vector<64x128xf32>
    %53 = vector.broadcast %39 : vector<64x1xf32> to vector<64x128xf32>
    %54 = arith.addf %52, %53 : vector<64x128xf32>
    %c0_20 = arith.constant 0 : index
    %c0_21 = arith.constant 0 : index
    %c0_22 = arith.constant 0 : index
    %55 = vector.load %arg2[%c0_20, %c0_21, %c0_22] : memref<2x64x1xf32, #tpu.memory_space<vmem>>, vector<1x64x1xf32>
    %56 = vector.shape_cast %55 : vector<1x64x1xf32> to vector<64x1xf32>
    %57 = vector.broadcast %56 : vector<64x1xf32> to vector<64x128xf32>
    %58 = arith.addf %54, %57 : vector<64x128xf32>
    %c0_23 = arith.constant 0 : index
    %c0_24 = arith.constant 0 : index
    %59 = vector.load %arg8[%c0_23, %c0_24] : memref<64x1xf32, #tpu.memory_space<vmem>>, vector<64x1xf32>
    %c0_25 = arith.constant 0 : index
    %c0_26 = arith.constant 0 : index
    %60 = vector.load %arg9[%c0_25, %c0_26] : memref<64x1xf32, #tpu.memory_space<vmem>>, vector<64x1xf32>
    %cst_27 = arith.constant dense<0.000000e+00> : vector<64xf32>
    %61 = vector.multi_reduction <add>, %58, %cst_27 [1] : vector<64x128xf32> to vector<64xf32>
    %62 = vector.shape_cast %61 : vector<64xf32> to vector<64x1xf32>
    %63 = arith.mulf %58, %58 : vector<64x128xf32>
    %cst_28 = arith.constant dense<0.000000e+00> : vector<64xf32>
    %64 = vector.multi_reduction <add>, %63, %cst_28 [1] : vector<64x128xf32> to vector<64xf32>
    %65 = vector.shape_cast %64 : vector<64xf32> to vector<64x1xf32>
    %66 = tpu.concatenate %62, %65 in 1 : vector<64x1xf32>, vector<64x1xf32> -> vector<64x2xf32>
    %c0_29 = arith.constant 0 : index
    %c0_30 = arith.constant 0 : index
    %67 = vector.load %arg10[%c0_29, %c0_30] : memref<64x64xf32, #tpu.memory_space<vmem>>, vector<64x64xf32>
    %cst_31 = arith.constant dense<0.000000e+00> : vector<64x2xf32>
    %68 = tpu.matmul %67, %66, %cst_31 {dimension_numbers = #tpu.dot_dimension_numbers<[1], [0], [0], [1], [0, 0, 1, 1], [], []>} : vector<64x64xf32>, vector<64x2xf32>, vector<64x2xf32> -> vector<64x2xf32>
    %cst_32 = arith.constant 3.906250e-03 : f32
    %69 = vector.broadcast %cst_32 : f32 to vector<64x2xf32>
    %70 = arith.mulf %68, %69 : vector<64x2xf32>
    %71 = vector.extract_strided_slice %70 {offsets = [0, 0], sizes = [64, 1], strides = [1, 1]} : vector<64x2xf32> to vector<64x1xf32>
    %72 = vector.extract_strided_slice %70 {offsets = [0, 1], sizes = [64, 1], strides = [1, 1]} : vector<64x2xf32> to vector<64x1xf32>
    %73 = arith.mulf %71, %71 : vector<64x1xf32>
    %74 = arith.subf %72, %73 : vector<64x1xf32>
    %cst_33 = arith.constant 0.000000e+00 : f32
    %75 = vector.broadcast %cst_33 : f32 to vector<64x1xf32>
    %76 = arith.maximumf %74, %75 : vector<64x1xf32>
    %77 = vector.broadcast %71 : vector<64x1xf32> to vector<64x128xf32>
    %78 = arith.subf %58, %77 : vector<64x128xf32>
    %cst_34 = arith.constant 9.99999997E-7 : f32
    %79 = vector.broadcast %cst_34 : f32 to vector<64x1xf32>
    %80 = arith.addf %76, %79 : vector<64x1xf32>
    %81 = math.rsqrt %80 : vector<64x1xf32>
    %82 = vector.broadcast %81 : vector<64x1xf32> to vector<64x128xf32>
    %83 = arith.mulf %78, %82 : vector<64x128xf32>
    %84 = vector.broadcast %59 : vector<64x1xf32> to vector<64x128xf32>
    %85 = arith.mulf %83, %84 : vector<64x128xf32>
    %86 = vector.broadcast %60 : vector<64x1xf32> to vector<64x128xf32>
    %87 = arith.addf %85, %86 : vector<64x128xf32>
    %88 = arith.negf %87 : vector<64x128xf32>
    %89 = math.exp %88 : vector<64x128xf32>
    %cst_35 = arith.constant 1.000000e+00 : f32
    %90 = vector.broadcast %cst_35 : f32 to vector<64x128xf32>
    %91 = arith.addf %90, %89 : vector<64x128xf32>
    %92 = arith.divf %90, %91 : vector<64x128xf32>
    %93 = arith.mulf %87, %92 : vector<64x128xf32>
    %c0_36 = arith.constant 0 : index
    %c0_37 = arith.constant 0 : index
    %94 = vector.load %arg12[%c0_36, %c0_37] : memref<64x1xf32, #tpu.memory_space<vmem>>, vector<64x1xf32>
    %c1_i32_38 = arith.constant 1 : i32
    %95 = tpu.dynamic_rotate %93 by %c1_i32_38 dim 1 : vector<64x128xf32>, i32 -> vector<64x128xf32>
    %cst_39 = arith.constant 0.000000e+00 : f32
    %96 = vector.shape_cast %2 : vector<1x128xi1> to vector<1x128xi1>
    %97 = vector.broadcast %96 : vector<1x128xi1> to vector<64x128xi1>
    %98 = vector.broadcast %cst_39 : f32 to vector<64x128xf32>
    %99 = arith.select %97, %98, %95 : vector<64x128xi1>, vector<64x128xf32>
    %c127_i32_40 = arith.constant 127 : i32
    %100 = tpu.dynamic_rotate %93 by %c127_i32_40 dim 1 : vector<64x128xf32>, i32 -> vector<64x128xf32>
    %cst_41 = arith.constant 0.000000e+00 : f32
    %101 = vector.shape_cast %4 : vector<1x128xi1> to vector<1x128xi1>
    %102 = vector.broadcast %101 : vector<1x128xi1> to vector<64x128xi1>
    %103 = vector.broadcast %cst_41 : f32 to vector<64x128xf32>
    %104 = arith.select %102, %103, %100 : vector<64x128xi1>, vector<64x128xf32>
    %105 = tpu.concatenate %99, %93, %104 in 0 : vector<64x128xf32>, vector<64x128xf32>, vector<64x128xf32> -> vector<192x128xf32>
    %c0_42 = arith.constant 0 : index
    %c0_43 = arith.constant 0 : index
    %106 = vector.load %arg11[%c0_42, %c0_43] : memref<64x192xf32, #tpu.memory_space<vmem>>, vector<64x192xf32>
    %cst_44 = arith.constant dense<0.000000e+00> : vector<64x128xf32>
    %107 = tpu.matmul %106, %105, %cst_44 {dimension_numbers = #tpu.dot_dimension_numbers<[1], [0], [0], [1], [0, 0, 1, 1], [], []>} : vector<64x192xf32>, vector<192x128xf32>, vector<64x128xf32> -> vector<64x128xf32>
    %108 = vector.broadcast %94 : vector<64x1xf32> to vector<64x128xf32>
    %109 = arith.addf %107, %108 : vector<64x128xf32>
    %c0_45 = arith.constant 0 : index
    %c0_46 = arith.constant 0 : index
    %110 = vector.load %arg13[%c0_45, %c0_46] : memref<64x32xf32, #tpu.memory_space<vmem>>, vector<64x32xf32>
    %cst_47 = arith.constant dense<0.000000e+00> : vector<64x128xf32>
    %111 = tpu.matmul %110, %6, %cst_47 {dimension_numbers = #tpu.dot_dimension_numbers<[1], [0], [0], [1], [0, 0, 1, 1], [], []>} : vector<64x32xf32>, vector<32x128xf32>, vector<64x128xf32> -> vector<64x128xf32>
    %c0_48 = arith.constant 0 : index
    %c0_49 = arith.constant 0 : index
    %112 = vector.load %arg14[%c0_48, %c0_49] : memref<64x1xf32, #tpu.memory_space<vmem>>, vector<64x1xf32>
    %113 = vector.broadcast %112 : vector<64x1xf32> to vector<64x128xf32>
    %114 = arith.addf %111, %113 : vector<64x128xf32>
    %115 = arith.addf %114, %109 : vector<64x128xf32>
    %c0_50 = arith.constant 0 : index
    %c0_51 = arith.constant 0 : index
    %c0_52 = arith.constant 0 : index
    %116 = vector.load %arg15[%c0_50, %c0_51, %c0_52] : memref<2x64x128xf32, #tpu.memory_space<vmem>>, vector<1x64x128xf32>
    %117 = vector.shape_cast %116 : vector<1x64x128xf32> to vector<64x128xf32>
    %118 = vector.shape_cast %115 : vector<64x128xf32> to vector<1x64x128xf32>
    tpu.vector_store %arg15[%c0_50, %c0_51, %c0_52], %118 {strides = array<i32>} : memref<2x64x128xf32, #tpu.memory_space<vmem>>, vector<1x64x128xf32>,
    %c1 = arith.constant 1 : index
    %c0_53 = arith.constant 0 : index
    %c0_54 = arith.constant 0 : index
    %119 = vector.load %arg1[%c1, %c0_53, %c0_54] : memref<2x32x128xf32, #tpu.memory_space<vmem>>, vector<1x32x128xf32>
    %120 = vector.shape_cast %119 : vector<1x32x128xf32> to vector<32x128xf32>
    %c0_55 = arith.constant 0 : index
    %c0_56 = arith.constant 0 : index
    %121 = vector.load %arg3[%c0_55, %c0_56] : memref<32x1xf32, #tpu.memory_space<vmem>>, vector<32x1xf32>
    %c0_57 = arith.constant 0 : index
    %c0_58 = arith.constant 0 : index
    %122 = vector.load %arg4[%c0_57, %c0_58] : memref<32x1xf32, #tpu.memory_space<vmem>>, vector<32x1xf32>
    %cst_59 = arith.constant dense<0.000000e+00> : vector<32xf32>
    %123 = vector.multi_reduction <add>, %120, %cst_59 [1] : vector<32x128xf32> to vector<32xf32>
    %124 = vector.shape_cast %123 : vector<32xf32> to vector<32x1xf32>
    %125 = arith.mulf %120, %120 : vector<32x128xf32>
    %cst_60 = arith.constant dense<0.000000e+00> : vector<32xf32>
    %126 = vector.multi_reduction <add>, %125, %cst_60 [1] : vector<32x128xf32> to vector<32xf32>
    %127 = vector.shape_cast %126 : vector<32xf32> to vector<32x1xf32>
    %cst_61 = arith.constant 7.812500e-03 : f32
    %128 = vector.broadcast %cst_61 : f32 to vector<32x1xf32>
    %129 = arith.mulf %124, %128 : vector<32x1xf32>
    %cst_62 = arith.constant 7.812500e-03 : f32
    %130 = vector.broadcast %cst_62 : f32 to vector<32x1xf32>
    %131 = arith.mulf %127, %130 : vector<32x1xf32>
    %132 = arith.mulf %129, %129 : vector<32x1xf32>
    %133 = arith.subf %131, %132 : vector<32x1xf32>
    %cst_63 = arith.constant 0.000000e+00 : f32
    %134 = vector.broadcast %cst_63 : f32 to vector<32x1xf32>
    %135 = arith.maximumf %133, %134 : vector<32x1xf32>
    %136 = vector.broadcast %129 : vector<32x1xf32> to vector<32x128xf32>
    %137 = arith.subf %120, %136 : vector<32x128xf32>
    %cst_64 = arith.constant 9.99999997E-7 : f32
    %138 = vector.broadcast %cst_64 : f32 to vector<32x1xf32>
    %139 = arith.addf %135, %138 : vector<32x1xf32>
    %140 = math.rsqrt %139 : vector<32x1xf32>
    %141 = vector.broadcast %140 : vector<32x1xf32> to vector<32x128xf32>
    %142 = arith.mulf %137, %141 : vector<32x128xf32>
    %143 = vector.broadcast %121 : vector<32x1xf32> to vector<32x128xf32>
    %144 = arith.mulf %142, %143 : vector<32x128xf32>
    %145 = vector.broadcast %122 : vector<32x1xf32> to vector<32x128xf32>
    %146 = arith.addf %144, %145 : vector<32x128xf32>
    %147 = arith.negf %146 : vector<32x128xf32>
    %148 = math.exp %147 : vector<32x128xf32>
    %cst_65 = arith.constant 1.000000e+00 : f32
    %149 = vector.broadcast %cst_65 : f32 to vector<32x128xf32>
    %150 = arith.addf %149, %148 : vector<32x128xf32>
    %151 = arith.divf %149, %150 : vector<32x128xf32>
    %152 = arith.mulf %146, %151 : vector<32x128xf32>
    %c0_66 = arith.constant 0 : index
    %c0_67 = arith.constant 0 : index
    %153 = vector.load %arg7[%c0_66, %c0_67] : memref<64x1xf32, #tpu.memory_space<vmem>>, vector<64x1xf32>
    %c1_i32_68 = arith.constant 1 : i32
    %154 = tpu.dynamic_rotate %152 by %c1_i32_68 dim 1 : vector<32x128xf32>, i32 -> vector<32x128xf32>
    %cst_69 = arith.constant 0.000000e+00 : f32
    %155 = vector.shape_cast %2 : vector<1x128xi1> to vector<1x128xi1>
    %156 = vector.broadcast %155 : vector<1x128xi1> to vector<32x128xi1>
    %157 = vector.broadcast %cst_69 : f32 to vector<32x128xf32>
    %158 = arith.select %156, %157, %154 : vector<32x128xi1>, vector<32x128xf32>
    %c127_i32_70 = arith.constant 127 : i32
    %159 = tpu.dynamic_rotate %152 by %c127_i32_70 dim 1 : vector<32x128xf32>, i32 -> vector<32x128xf32>
    %cst_71 = arith.constant 0.000000e+00 : f32
    %160 = vector.shape_cast %4 : vector<1x128xi1> to vector<1x128xi1>
    %161 = vector.broadcast %160 : vector<1x128xi1> to vector<32x128xi1>
    %162 = vector.broadcast %cst_71 : f32 to vector<32x128xf32>
    %163 = arith.select %161, %162, %159 : vector<32x128xi1>, vector<32x128xf32>
    %164 = tpu.concatenate %158, %152, %163 in 0 : vector<32x128xf32>, vector<32x128xf32>, vector<32x128xf32> -> vector<96x128xf32>
    %c0_72 = arith.constant 0 : index
    %c0_73 = arith.constant 0 : index
    %165 = vector.load %arg6[%c0_72, %c0_73] : memref<64x96xf32, #tpu.memory_space<vmem>>, vector<64x96xf32>
    %cst_74 = arith.constant dense<0.000000e+00> : vector<64x128xf32>
    %166 = tpu.matmul %165, %164, %cst_74 {dimension_numbers = #tpu.dot_dimension_numbers<[1], [0], [0], [1], [0, 0, 1, 1], [], []>} : vector<64x96xf32>, vector<96x128xf32>, vector<64x128xf32> -> vector<64x128xf32>
    %167 = vector.broadcast %153 : vector<64x1xf32> to vector<64x128xf32>
    %168 = arith.addf %166, %167 : vector<64x128xf32>
    %c1_75 = arith.constant 1 : index
    %c0_76 = arith.constant 0 : index
    %c0_77 = arith.constant 0 : index
    %169 = vector.load %arg2[%c1_75, %c0_76, %c0_77] : memref<2x64x1xf32, #tpu.memory_space<vmem>>, vector<1x64x1xf32>
    %170 = vector.shape_cast %169 : vector<1x64x1xf32> to vector<64x1xf32>
    %171 = vector.broadcast %170 : vector<64x1xf32> to vector<64x128xf32>
    %172 = arith.addf %168, %171 : vector<64x128xf32>
    %c0_78 = arith.constant 0 : index
    %c0_79 = arith.constant 0 : index
    %173 = vector.load %arg8[%c0_78, %c0_79] : memref<64x1xf32, #tpu.memory_space<vmem>>, vector<64x1xf32>
    %c0_80 = arith.constant 0 : index
    %c0_81 = arith.constant 0 : index
    %174 = vector.load %arg9[%c0_80, %c0_81] : memref<64x1xf32, #tpu.memory_space<vmem>>, vector<64x1xf32>
    %cst_82 = arith.constant dense<0.000000e+00> : vector<64xf32>
    %175 = vector.multi_reduction <add>, %172, %cst_82 [1] : vector<64x128xf32> to vector<64xf32>
    %176 = vector.shape_cast %175 : vector<64xf32> to vector<64x1xf32>
    %177 = arith.mulf %172, %172 : vector<64x128xf32>
    %cst_83 = arith.constant dense<0.000000e+00> : vector<64xf32>
    %178 = vector.multi_reduction <add>, %177, %cst_83 [1] : vector<64x128xf32> to vector<64xf32>
    %179 = vector.shape_cast %178 : vector<64xf32> to vector<64x1xf32>
    %180 = tpu.concatenate %176, %179 in 1 : vector<64x1xf32>, vector<64x1xf32> -> vector<64x2xf32>
    %c0_84 = arith.constant 0 : index
    %c0_85 = arith.constant 0 : index
    %181 = vector.load %arg10[%c0_84, %c0_85] : memref<64x64xf32, #tpu.memory_space<vmem>>, vector<64x64xf32>
    %cst_86 = arith.constant dense<0.000000e+00> : vector<64x2xf32>
    %182 = tpu.matmul %181, %180, %cst_86 {dimension_numbers = #tpu.dot_dimension_numbers<[1], [0], [0], [1], [0, 0, 1, 1], [], []>} : vector<64x64xf32>, vector<64x2xf32>, vector<64x2xf32> -> vector<64x2xf32>
    %cst_87 = arith.constant 3.906250e-03 : f32
    %183 = vector.broadcast %cst_87 : f32 to vector<64x2xf32>
    %184 = arith.mulf %182, %183 : vector<64x2xf32>
    %185 = vector.extract_strided_slice %184 {offsets = [0, 0], sizes = [64, 1], strides = [1, 1]} : vector<64x2xf32> to vector<64x1xf32>
    %186 = vector.extract_strided_slice %184 {offsets = [0, 1], sizes = [64, 1], strides = [1, 1]} : vector<64x2xf32> to vector<64x1xf32>
    %187 = arith.mulf %185, %185 : vector<64x1xf32>
    %188 = arith.subf %186, %187 : vector<64x1xf32>
    %cst_88 = arith.constant 0.000000e+00 : f32
    %189 = vector.broadcast %cst_88 : f32 to vector<64x1xf32>
    %190 = arith.maximumf %188, %189 : vector<64x1xf32>
    %191 = vector.broadcast %185 : vector<64x1xf32> to vector<64x128xf32>
    %192 = arith.subf %172, %191 : vector<64x128xf32>
    %cst_89 = arith.constant 9.99999997E-7 : f32
    %193 = vector.broadcast %cst_89 : f32 to vector<64x1xf32>
    %194 = arith.addf %190, %193 : vector<64x1xf32>
    %195 = math.rsqrt %194 : vector<64x1xf32>
    %196 = vector.broadcast %195 : vector<64x1xf32> to vector<64x128xf32>
    %197 = arith.mulf %192, %196 : vector<64x128xf32>
    %198 = vector.broadcast %173 : vector<64x1xf32> to vector<64x128xf32>
    %199 = arith.mulf %197, %198 : vector<64x128xf32>
    %200 = vector.broadcast %174 : vector<64x1xf32> to vector<64x128xf32>
    %201 = arith.addf %199, %200 : vector<64x128xf32>
    %202 = arith.negf %201 : vector<64x128xf32>
    %203 = math.exp %202 : vector<64x128xf32>
    %cst_90 = arith.constant 1.000000e+00 : f32
    %204 = vector.broadcast %cst_90 : f32 to vector<64x128xf32>
    %205 = arith.addf %204, %203 : vector<64x128xf32>
    %206 = arith.divf %204, %205 : vector<64x128xf32>
    %207 = arith.mulf %201, %206 : vector<64x128xf32>
    %c0_91 = arith.constant 0 : index
    %c0_92 = arith.constant 0 : index
    %208 = vector.load %arg12[%c0_91, %c0_92] : memref<64x1xf32, #tpu.memory_space<vmem>>, vector<64x1xf32>
    %c1_i32_93 = arith.constant 1 : i32
    %209 = tpu.dynamic_rotate %207 by %c1_i32_93 dim 1 : vector<64x128xf32>, i32 -> vector<64x128xf32>
    %cst_94 = arith.constant 0.000000e+00 : f32
    %210 = vector.shape_cast %2 : vector<1x128xi1> to vector<1x128xi1>
    %211 = vector.broadcast %210 : vector<1x128xi1> to vector<64x128xi1>
    %212 = vector.broadcast %cst_94 : f32 to vector<64x128xf32>
    %213 = arith.select %211, %212, %209 : vector<64x128xi1>, vector<64x128xf32>
    %c127_i32_95 = arith.constant 127 : i32
    %214 = tpu.dynamic_rotate %207 by %c127_i32_95 dim 1 : vector<64x128xf32>, i32 -> vector<64x128xf32>
    %cst_96 = arith.constant 0.000000e+00 : f32
    %215 = vector.shape_cast %4 : vector<1x128xi1> to vector<1x128xi1>
    %216 = vector.broadcast %215 : vector<1x128xi1> to vector<64x128xi1>
    %217 = vector.broadcast %cst_96 : f32 to vector<64x128xf32>
    %218 = arith.select %216, %217, %214 : vector<64x128xi1>, vector<64x128xf32>
    %219 = tpu.concatenate %213, %207, %218 in 0 : vector<64x128xf32>, vector<64x128xf32>, vector<64x128xf32> -> vector<192x128xf32>
    %c0_97 = arith.constant 0 : index
    %c0_98 = arith.constant 0 : index
    %220 = vector.load %arg11[%c0_97, %c0_98] : memref<64x192xf32, #tpu.memory_space<vmem>>, vector<64x192xf32>
    %cst_99 = arith.constant dense<0.000000e+00> : vector<64x128xf32>
    %221 = tpu.matmul %220, %219, %cst_99 {dimension_numbers = #tpu.dot_dimension_numbers<[1], [0], [0], [1], [0, 0, 1, 1], [], []>} : vector<64x192xf32>, vector<192x128xf32>, vector<64x128xf32> -> vector<64x128xf32>
    %222 = vector.broadcast %208 : vector<64x1xf32> to vector<64x128xf32>
    %223 = arith.addf %221, %222 : vector<64x128xf32>
    %c0_100 = arith.constant 0 : index
    %c0_101 = arith.constant 0 : index
    %224 = vector.load %arg13[%c0_100, %c0_101] : memref<64x32xf32, #tpu.memory_space<vmem>>, vector<64x32xf32>
    %cst_102 = arith.constant dense<0.000000e+00> : vector<64x128xf32>
    %225 = tpu.matmul %224, %120, %cst_102 {dimension_numbers = #tpu.dot_dimension_numbers<[1], [0], [0], [1], [0, 0, 1, 1], [], []>} : vector<64x32xf32>, vector<32x128xf32>, vector<64x128xf32> -> vector<64x128xf32>
    %c0_103 = arith.constant 0 : index
    %c0_104 = arith.constant 0 : index
    %226 = vector.load %arg14[%c0_103, %c0_104] : memref<64x1xf32, #tpu.memory_space<vmem>>, vector<64x1xf32>
    %227 = vector.broadcast %226 : vector<64x1xf32> to vector<64x128xf32>
    %228 = arith.addf %225, %227 : vector<64x128xf32>
    %229 = arith.addf %228, %223 : vector<64x128xf32>
    %c1_105 = arith.constant 1 : index
    %c0_106 = arith.constant 0 : index
    %c0_107 = arith.constant 0 : index
    %230 = vector.load %arg15[%c1_105, %c0_106, %c0_107] : memref<2x64x128xf32, #tpu.memory_space<vmem>>, vector<1x64x128xf32>
    %231 = vector.shape_cast %230 : vector<1x64x128xf32> to vector<64x128xf32>
    %232 = vector.shape_cast %229 : vector<64x128xf32> to vector<1x64x128xf32>
    tpu.vector_store %arg15[%c1_105, %c0_106, %c0_107], %232 {strides = array<i32>} : memref<2x64x128xf32, #tpu.memory_space<vmem>>, vector<1x64x128xf32>,
    return
  }
  func.func @transform_0(%arg0: i32) -> (i32, i32, i32) {
    %c0_i32 = arith.constant 0 : i32
    %c0_i32_0 = arith.constant 0 : i32
    %c0_i32_1 = arith.constant 0 : i32
    return %arg0, %c0_i32, %c0_i32_0 : i32, i32, i32
  }
  func.func @transform_1(%arg0: i32) -> (i32, i32, i32) {
    %c0_i32 = arith.constant 0 : i32
    %c0_i32_0 = arith.constant 0 : i32
    %c0_i32_1 = arith.constant 0 : i32
    return %arg0, %c0_i32, %c0_i32_0 : i32, i32, i32
  }
  func.func @transform_2(%arg0: i32) -> (i32, i32) {
    %c0_i32 = arith.constant 0 : i32
    %c0_i32_0 = arith.constant 0 : i32
    %c0_i32_1 = arith.constant 0 : i32
    return %c0_i32, %c0_i32_0 : i32, i32
  }
  func.func @transform_3(%arg0: i32) -> (i32, i32) {
    %c0_i32 = arith.constant 0 : i32
    %c0_i32_0 = arith.constant 0 : i32
    %c0_i32_1 = arith.constant 0 : i32
    return %c0_i32, %c0_i32_0 : i32, i32
  }
  func.func @transform_4(%arg0: i32) -> (i32, i32) {
    %c0_i32 = arith.constant 0 : i32
    %c0_i32_0 = arith.constant 0 : i32
    %c0_i32_1 = arith.constant 0 : i32
    return %c0_i32, %c0_i32_0 : i32, i32
  }
  func.func @transform_5(%arg0: i32) -> (i32, i32) {
    %c0_i32 = arith.constant 0 : i32
    %c0_i32_0 = arith.constant 0 : i32
    %c0_i32_1 = arith.constant 0 : i32
    return %c0_i32, %c0_i32_0 : i32, i32
  }
  func.func @transform_6(%arg0: i32) -> (i32, i32) {
    %c0_i32 = arith.constant 0 : i32
    %c0_i32_0 = arith.constant 0 : i32
    %c0_i32_1 = arith.constant 0 : i32
    return %c0_i32, %c0_i32_0 : i32, i32
  }
  func.func @transform_7(%arg0: i32) -> (i32, i32) {
    %c0_i32 = arith.constant 0 : i32
    %c0_i32_0 = arith.constant 0 : i32
    %c0_i32_1 = arith.constant 0 : i32
    return %c0_i32, %c0_i32_0 : i32, i32
  }
  func.func @transform_8(%arg0: i32) -> (i32, i32) {
    %c0_i32 = arith.constant 0 : i32
    %c0_i32_0 = arith.constant 0 : i32
    %c0_i32_1 = arith.constant 0 : i32
    return %c0_i32, %c0_i32_0 : i32, i32
  }
  func.func @transform_9(%arg0: i32) -> (i32, i32) {
    %c0_i32 = arith.constant 0 : i32
    %c0_i32_0 = arith.constant 0 : i32
    %c0_i32_1 = arith.constant 0 : i32
    return %c0_i32, %c0_i32_0 : i32, i32
  }
  func.func @transform_10(%arg0: i32) -> (i32, i32) {
    %c0_i32 = arith.constant 0 : i32
    %c0_i32_0 = arith.constant 0 : i32
    %c0_i32_1 = arith.constant 0 : i32
    return %c0_i32, %c0_i32_0 : i32, i32
  }
  func.func @transform_11(%arg0: i32) -> (i32, i32) {
    %c0_i32 = arith.constant 0 : i32
    %c0_i32_0 = arith.constant 0 : i32
    %c0_i32_1 = arith.constant 0 : i32
    return %c0_i32, %c0_i32_0 : i32, i32
  }
  func.func @transform_12(%arg0: i32) -> (i32, i32) {
    %c0_i32 = arith.constant 0 : i32
    %c0_i32_0 = arith.constant 0 : i32
    %c0_i32_1 = arith.constant 0 : i32
    return %c0_i32, %c0_i32_0 : i32, i32
  }
  func.func @transform_13(%arg0: i32) -> (i32, i32) {
    %c0_i32 = arith.constant 0 : i32
    %c0_i32_0 = arith.constant 0 : i32
    %c0_i32_1 = arith.constant 0 : i32
    return %c0_i32, %c0_i32_0 : i32, i32
  }
  func.func @transform_14(%arg0: i32) -> (i32, i32, i32) {
    %c0_i32 = arith.constant 0 : i32
    %c0_i32_0 = arith.constant 0 : i32
    %c0_i32_1 = arith.constant 0 : i32
    return %arg0, %c0_i32, %c0_i32_0 : i32, i32, i32
  }
}

</mosaic_0001>

<llo_original>
// kernel: tpu_custom_call.1
$region0: #{tpu_custom_call.1}
  #allocation0 [shape = 'u32[]', space=smem, size = 0x4, offset = 0x4, fixed_abs, tag = 'smem constant byte address 0x4 - core index']
  #allocation1 [shape = 'u32[144,128]{1,0:T(1,128)}', space=vmem, size = 0x12000, scoped, tag = 'internal scratch']
  %s0 = inlined_call_operand.vmem [shape: f32[2,32,128], index: 0, kind: input, shape index: {}]
  %s1 = inlined_call_operand.vmem [shape: f32[2,64,1], index: 1, kind: input, shape index: {}]
  %s2 = inlined_call_operand.vmem [shape: f32[32,1], index: 2, kind: input, shape index: {}]
  %s3 = inlined_call_operand.vmem [shape: f32[32,1], index: 3, kind: input, shape index: {}]
  %s4 = inlined_call_operand.vmem [shape: f32[32,32], index: 4, kind: input, shape index: {}]
  %s5 = inlined_call_operand.vmem [shape: f32[64,96], index: 5, kind: input, shape index: {}]
  %s6 = inlined_call_operand.vmem [shape: f32[64,1], index: 6, kind: input, shape index: {}]
  %s7 = inlined_call_operand.vmem [shape: f32[64,1], index: 7, kind: input, shape index: {}]
  %s8 = inlined_call_operand.vmem [shape: f32[64,1], index: 8, kind: input, shape index: {}]
  %s9 = inlined_call_operand.vmem [shape: f32[64,64], index: 9, kind: input, shape index: {}]
  %s10 = inlined_call_operand.vmem [shape: f32[64,192], index: 10, kind: input, shape index: {}]
  %s11 = inlined_call_operand.vmem [shape: f32[64,1], index: 11, kind: input, shape index: {}]
  %s12 = inlined_call_operand.vmem [shape: f32[64,32], index: 12, kind: input, shape index: {}]
  %s13 = inlined_call_operand.vmem [shape: f32[64,1], index: 13, kind: input, shape index: {}]
  %s14 = inlined_call_operand.hbm [shape: f32[2,64,128], index: 14, kind: output, shape index: {}]
  %s15 = sld [smem:[#allocation0]]
  $region66: #{tpu_custom_call.1} parent=0
    _
  %s17 = ssub.s32 1, %s15
  %s18 = scalar_select 0, %s17, %s15
  $region1: #{tpu_custom_call.1} parent=0
    #allocation2 [shape = 'u8[65536]{0}', space=vmem, size = 0x10000, scoped, tag = 'output window, operand 0, single buffered']
    #allocation3 [shape = 's32[1]{0}', space=sflag, size = 0x4, scoped, tag = 'scoped memory for tpu_custom_call.1']
    %19 = vsyncpa [#allocation3], 0
    // Predicated region
    $region2: #{tpu_custom_call.1} parent=1 // pred_check
      _
    $region3: #{tpu_custom_call.1} parent=1 // pred_check_branch
      %21 = sbr.rel (0) target = $region5
    $region4: #{tpu_custom_call.1} parent=1 // pred_region
      _
    $region5: #{tpu_custom_call.1} parent=1 // pred_fallthru
      _
    // Predicated region
    $region6: #{tpu_custom_call.1} parent=1 // pred_check
      _
    $region7: #{tpu_custom_call.1} parent=1 // pred_check_branch
      %23 = sbr.rel (0) target = $region9
    $region8: #{tpu_custom_call.1} parent=1 // pred_region
      _
    $region9: #{tpu_custom_call.1} parent=1 // pred_fallthru
      _
    // Predicated region
    $region10: #{tpu_custom_call.1} parent=1 // pred_check
      _
    $region11: #{tpu_custom_call.1} parent=1 // pred_check_branch
      %25 = sbr.rel (0) target = $region13
    $region12: #{tpu_custom_call.1} parent=1 // pred_region
      _
    $region13: #{tpu_custom_call.1} parent=1 // pred_fallthru
      _
    // Predicated region
    $region14: #{tpu_custom_call.1} parent=1 // pred_check
      _
    $region15: #{tpu_custom_call.1} parent=1 // pred_check_branch
      %27 = sbr.rel (0) target = $region17
    $region16: #{tpu_custom_call.1} parent=1 // pred_region
      _
    $region17: #{tpu_custom_call.1} parent=1 // pred_fallthru
      _
    // Predicated region
    $region18: #{tpu_custom_call.1} parent=1 // pred_check
      _
    $region19: #{tpu_custom_call.1} parent=1 // pred_check_branch
      %29 = sbr.rel (0) target = $region21
    $region20: #{tpu_custom_call.1} parent=1 // pred_region
      _
    $region21: #{tpu_custom_call.1} parent=1 // pred_fallthru
      _
    // Predicated region
    $region22: #{tpu_custom_call.1} parent=1 // pred_check
      _
    $region23: #{tpu_custom_call.1} parent=1 // pred_check_branch
      %31 = sbr.rel (0) target = $region25
    $region24: #{tpu_custom_call.1} parent=1 // pred_region
      _
    $region25: #{tpu_custom_call.1} parent=1 // pred_fallthru
      _
    // Predicated region
    $region26: #{tpu_custom_call.1} parent=1 // pred_check
      _
    $region27: #{tpu_custom_call.1} parent=1 // pred_check_branch
      %33 = sbr.rel (0) target = $region29
    $region28: #{tpu_custom_call.1} parent=1 // pred_region
      _
    $region29: #{tpu_custom_call.1} parent=1 // pred_fallthru
      _
    // Predicated region
    $region30: #{tpu_custom_call.1} parent=1 // pred_check
      _
    $region31: #{tpu_custom_call.1} parent=1 // pred_check_branch
      %35 = sbr.rel (0) target = $region33
    $region32: #{tpu_custom_call.1} parent=1 // pred_region
      _
    $region33: #{tpu_custom_call.1} parent=1 // pred_fallthru
      _
    // Predicated region
    $region34: #{tpu_custom_call.1} parent=1 // pred_check
      _
    $region35: #{tpu_custom_call.1} parent=1 // pred_check_branch
      %37 = sbr.rel (0) target = $region37
    $region36: #{tpu_custom_call.1} parent=1 // pred_region
      _
    $region37: #{tpu_custom_call.1} parent=1 // pred_fallthru
      _
    // Predicated region
    $region38: #{tpu_custom_call.1} parent=1 // pred_check
      _
    $region39: #{tpu_custom_call.1} parent=1 // pred_check_branch
      %39 = sbr.rel (0) target = $region41
    $region40: #{tpu_custom_call.1} parent=1 // pred_region
      _
    $region41: #{tpu_custom_call.1} parent=1 // pred_fallthru
      _
    // Predicated region
    $region42: #{tpu_custom_call.1} parent=1 // pred_check
      _
    $region43: #{tpu_custom_call.1} parent=1 // pred_check_branch
      %41 = sbr.rel (0) target = $region45
    $region44: #{tpu_custom_call.1} parent=1 // pred_region
      _
    $region45: #{tpu_custom_call.1} parent=1 // pred_fallthru
      _
    // Predicated region
    $region46: #{tpu_custom_call.1} parent=1 // pred_check
      _
    $region47: #{tpu_custom_call.1} parent=1 // pred_check_branch
      %43 = sbr.rel (0) target = $region49
    $region48: #{tpu_custom_call.1} parent=1 // pred_region
      _
    $region49: #{tpu_custom_call.1} parent=1 // pred_fallthru
      _
    // Predicated region
    $region50: #{tpu_custom_call.1} parent=1 // pred_check
      _
    $region51: #{tpu_custom_call.1} parent=1 // pred_check_branch
      %45 = sbr.rel (0) target = $region53
    $region52: #{tpu_custom_call.1} parent=1 // pred_region
      _
    $region53: #{tpu_custom_call.1} parent=1 // pred_fallthru
      _
    // Predicated region
    $region54: #{tpu_custom_call.1} parent=1 // pred_check
      _
    $region55: #{tpu_custom_call.1} parent=1 // pred_check_branch
      %47 = sbr.rel (0) target = $region57
    $region56: #{tpu_custom_call.1} parent=1 // pred_region
      _
    $region57: #{tpu_custom_call.1} parent=1 // pred_fallthru
      _
    %v48 = vlaneseq
    %v49 = vand.u32 %v48, 127
    %vm50 = vcmp.eq.s32.totalorder %v49, 0
    %vm51 = vcmp.eq.s32.totalorder %v49, 127
    %v52 = vld [vmem:[%s0] sm:$0xff]
    %v53 = vld [vmem:[%s0 + $0x8] sm:$0xff]
    %v54 = vld [vmem:[%s0 + $0x10] sm:$0xff]
    %v55 = vld [vmem:[%s0 + $0x18] sm:$0xff]
    %v56 = vld [vmem:[%s2] sm:$0xff]
    %v57 = vld [vmem:[%s2 + $0x8] sm:$0xff]
    %v58 = vld [vmem:[%s2 + $0x10] sm:$0xff]
    %v59 = vld [vmem:[%s2 + $0x18] sm:$0xff]
    %v60 = vld [vmem:[%s3] sm:$0xff]
    %v61 = vld [vmem:[%s3 + $0x8] sm:$0xff]
    %v62 = vld [vmem:[%s3 + $0x10] sm:$0xff]
    %v63 = vld [vmem:[%s3 + $0x18] sm:$0xff]
    %64 = vadd.xlane.f32.xlu0 %v52
    %v65 = vpop.xlane.xlu0 %64
    %66 = vadd.xlane.f32.xlu0 %v53
    %v67 = vpop.xlane.xlu0 %66
    %68 = vadd.xlane.f32.xlu0 %v54
    %v69 = vpop.xlane.xlu0 %68
    %70 = vadd.xlane.f32.xlu0 %v55
    %v71 = vpop.xlane.xlu0 %70
    %v72 = vmul.f32 %v52, %v52
    %v73 = vmul.f32 %v53, %v53
    %v74 = vmul.f32 %v54, %v54
    %v75 = vmul.f32 %v55, %v55
    %76 = vadd.xlane.f32.xlu0 %v72
    %v77 = vpop.xlane.xlu0 %76
    %78 = vadd.xlane.f32.xlu0 %v73
    %v79 = vpop.xlane.xlu0 %78
    %80 = vadd.xlane.f32.xlu0 %v74
    %v81 = vpop.xlane.xlu0 %80
    %82 = vadd.xlane.f32.xlu0 %v75
    %v83 = vpop.xlane.xlu0 %82
    %v84 = vmul.f32 %v65, 0.0078125
    %v85 = vmul.f32 %v67, 0.0078125
    %v86 = vmul.f32 %v69, 0.0078125
    %v87 = vmul.f32 %v71, 0.0078125
    %v88 = vmul.f32 %v77, 0.0078125
    %v89 = vmul.f32 %v79, 0.0078125
    %v90 = vmul.f32 %v81, 0.0078125
    %v91 = vmul.f32 %v83, 0.0078125
    %v92 = vmul.f32 %v84, %v84
    %v93 = vmul.f32 %v85, %v85
    %v94 = vmul.f32 %v86, %v86
    %v95 = vmul.f32 %v87, %v87
    %v96 = vsub.f32 %v88, %v92
    %v97 = vsub.f32 %v89, %v93
    %v98 = vsub.f32 %v90, %v94
    %v99 = vsub.f32 %v91, %v95
    %v100 = vmax.f32 %v96, 0.0
    %v101 = vmax.f32 %v97, 0.0
    %v102 = vmax.f32 %v98, 0.0
    %v103 = vmax.f32 %v99, 0.0
    %v104 = vsub.f32 %v52, %v84
    %v105 = vsub.f32 %v53, %v85
    %v106 = vsub.f32 %v54, %v86
    %v107 = vsub.f32 %v55, %v87
    %v108 = vadd.f32 %v100, 1e-06
    %v109 = vadd.f32 %v101, 1e-06
    %v110 = vadd.f32 %v102, 1e-06
    %v111 = vadd.f32 %v103, 1e-06
    %v112 = vrsqrt.pop %v108
    %v113 = vrsqrt.pop %v109
    %v114 = vrsqrt.pop %v110
    %v115 = vrsqrt.pop %v111
    %v116 = vmul.f32 %v104, %v112
    %v117 = vmul.f32 %v105, %v113
    %v118 = vmul.f32 %v106, %v114
    %v119 = vmul.f32 %v107, %v115
    %121 = vset.pattern.permute.xlu0 0
    %122 = vperm.xlu0 %121, %v56
    %v123 = vpop.permute.xlu0 %122
    %126 = vset.pattern.permute.xlu0 0
    %127 = vperm.xlu0 %126, %v57
    %v128 = vpop.permute.xlu0 %127
    %131 = vset.pattern.permute.xlu0 0
    %132 = vperm.xlu0 %131, %v58
    %v133 = vpop.permute.xlu0 %132
    %136 = vset.pattern.permute.xlu0 0
    %137 = vperm.xlu0 %136, %v59
    %v138 = vpop.permute.xlu0 %137
    %v140 = vmul.f32 %v116, %v123
    %v141 = vmul.f32 %v117, %v128
    %v142 = vmul.f32 %v118, %v133
    %v143 = vmul.f32 %v119, %v138
    %145 = vset.pattern.permute.xlu0 0
    %146 = vperm.xlu0 %145, %v60
    %v147 = vpop.permute.xlu0 %146
    %150 = vset.pattern.permute.xlu0 0
    %151 = vperm.xlu0 %150, %v61
    %v152 = vpop.permute.xlu0 %151
    %155 = vset.pattern.permute.xlu0 0
    %156 = vperm.xlu0 %155, %v62
    %v157 = vpop.permute.xlu0 %156
    %160 = vset.pattern.permute.xlu0 0
    %161 = vperm.xlu0 %160, %v63
    %v162 = vpop.permute.xlu0 %161
    %v164 = vadd.f32 %v140, %v147
    %v165 = vadd.f32 %v141, %v152
    %v166 = vadd.f32 %v142, %v157
    %v167 = vadd.f32 %v143, %v162
    %v168 = vxor.u32 %v164, 2147483648
    %v169 = vxor.u32 %v165, 2147483648
    %v170 = vxor.u32 %v166, 2147483648
    %v171 = vxor.u32 %v167, 2147483648
    %v172 = vmul.f32 %v168, 1.442695
    %v173 = vpow.pop %v172
    %v174 = vmul.f32 %v169, 1.442695
    %v175 = vpow.pop %v174
    %v176 = vmul.f32 %v170, 1.442695
    %v177 = vpow.pop %v176
    %v178 = vmul.f32 %v171, 1.442695
    %v179 = vpow.pop %v178
    %v180 = vadd.f32 %v173, 1.0
    %v181 = vadd.f32 %v175, 1.0
    %v182 = vadd.f32 %v177, 1.0
    %v183 = vadd.f32 %v179, 1.0
    %v184 = vrcp.pop %v180
    %v185 = vmul.f32 1.0, %v184
    %v186 = vrcp.pop %v181
    %v187 = vmul.f32 1.0, %v186
    %v188 = vrcp.pop %v182
    %v189 = vmul.f32 1.0, %v188
    %v190 = vrcp.pop %v183
    %v191 = vmul.f32 1.0, %v190
    %v192 = vmul.f32 %v164, %v185
    %v193 = vmul.f32 %v165, %v187
    %v194 = vmul.f32 %v166, %v189
    %v195 = vmul.f32 %v167, %v191
    %v196 = vld [vmem:[%s6] sm:$0xff]
    %v197 = vld [vmem:[%s6 + $0x8] sm:$0xff]
    %v198 = vld [vmem:[%s6 + $0x10] sm:$0xff]
    %v199 = vld [vmem:[%s6 + $0x18] sm:$0xff]
    %v200 = vld [vmem:[%s6 + $0x20] sm:$0xff]
    %v201 = vld [vmem:[%s6 + $0x28] sm:$0xff]
    %v202 = vld [vmem:[%s6 + $0x30] sm:$0xff]
    %v203 = vld [vmem:[%s6 + $0x38] sm:$0xff]
    %204 = vrot.lane.b32.xlu0 %v192, 1
    %v205 = vpop.permute.xlu0 %204
    %206 = vrot.lane.b32.xlu0 %v193, 1
    %v207 = vpop.permute.xlu0 %206
    %208 = vrot.lane.b32.xlu0 %v194, 1
    %v209 = vpop.permute.xlu0 %208
    %210 = vrot.lane.b32.xlu0 %v195, 1
    %v211 = vpop.permute.xlu0 %210
    %v212 = vsel %vm50, 1, 0
    %vm213 = vcmp.eq.s32.totalorder %v212, 1
    %v214 = vsel %vm213, 0.0, %v205
    %v215 = vsel %vm213, 0.0, %v207
    %v216 = vsel %vm213, 0.0, %v209
    %v217 = vsel %vm213, 0.0, %v211
    %218 = vrot.lane.b32.xlu0 %v192, 127
    %v219 = vpop.permute.xlu0 %218
    %220 = vrot.lane.b32.xlu0 %v193, 127
    %v221 = vpop.permute.xlu0 %220
    %222 = vrot.lane.b32.xlu0 %v194, 127
    %v223 = vpop.permute.xlu0 %222
    %224 = vrot.lane.b32.xlu0 %v195, 127
    %v225 = vpop.permute.xlu0 %224
    %v226 = vsel %vm51, 1, 0
    %vm227 = vcmp.eq.s32.totalorder %v226, 1
    %v228 = vsel %vm227, 0.0, %v219
    %v229 = vsel %vm227, 0.0, %v221
    %v230 = vsel %vm227, 0.0, %v223
    %v231 = vsel %vm227, 0.0, %v225
    %v232 = vld [vmem:[%s5] sm:$0xff]
    %v233 = vld [vmem:[%s5 + $0x8] sm:$0xff]
    %v234 = vld [vmem:[%s5 + $0x10] sm:$0xff]
    %v235 = vld [vmem:[%s5 + $0x18] sm:$0xff]
    %v236 = vld [vmem:[%s5 + $0x20] sm:$0xff]
    %v237 = vld [vmem:[%s5 + $0x28] sm:$0xff]
    %v238 = vld [vmem:[%s5 + $0x30] sm:$0xff]
    %v239 = vld [vmem:[%s5 + $0x38] sm:$0xff]
    %241 = vset.pattern.permute.xlu0 0
    %242 = vperm.xlu0 %241, %v196
    %v243 = vpop.permute.xlu0 %242
    %246 = vset.pattern.permute.xlu0 0
    %247 = vperm.xlu0 %246, %v197
    %v248 = vpop.permute.xlu0 %247
    %251 = vset.pattern.permute.xlu0 0
    %252 = vperm.xlu0 %251, %v198
    %v253 = vpop.permute.xlu0 %252
    %256 = vset.pattern.permute.xlu0 0
    %257 = vperm.xlu0 %256, %v199
    %v258 = vpop.permute.xlu0 %257
    %261 = vset.pattern.permute.xlu0 0
    %262 = vperm.xlu0 %261, %v200
    %v263 = vpop.permute.xlu0 %262
    %266 = vset.pattern.permute.xlu0 0
    %267 = vperm.xlu0 %266, %v201
    %v268 = vpop.permute.xlu0 %267
    %271 = vset.pattern.permute.xlu0 0
    %272 = vperm.xlu0 %271, %v202
    %v273 = vpop.permute.xlu0 %272
    %276 = vset.pattern.permute.xlu0 0
    %277 = vperm.xlu0 %276, %v203
    %v278 = vpop.permute.xlu0 %277
    %vm280 = vcmask 785408
    %v282 = vsel %vm280, %v232, 0
    %v285 = vsel %vm280, %v233, 0
    %v288 = vsel %vm280, %v234, 0
    %v291 = vsel %vm280, %v235, 0
    %v294 = vsel %vm280, %v236, 0
    %v297 = vsel %vm280, %v237, 0
    %v300 = vsel %vm280, %v238, 0
    %v303 = vsel %vm280, %v239, 0
    %305 = vmatprep.subr.mxu0 0.0
    %306 = vmatpush1.msra.mxu0 %v214
    %307 = vmatprep.subr.mxu0 0.0
    %308 = vmatpush1.msra.mxu0 %v215
    %309 = vmatprep.subr.mxu0 0.0
    %310 = vmatpush1.msra.mxu0 %v216
    %311 = vmatprep.subr.mxu0 0.0
    %312 = vmatpush1.msra.mxu0 %v217
    %313 = vmatprep.subr.mxu0 0.0
    %314 = vmatpush1.msra.mxu0 %v192
    %315 = vmatprep.subr.mxu0 0.0
    %316 = vmatpush1.msra.mxu0 %v193
    %317 = vmatprep.subr.mxu0 0.0
    %318 = vmatpush1.msra.mxu0 %v194
    %319 = vmatprep.subr.mxu0 0.0
    %320 = vmatpush1.msra.mxu0 %v195
    %321 = vmatprep.subr.mxu0 0.0
    %322 = vmatpush1.msra.mxu0 %v228
    %323 = vmatprep.subr.mxu0 0.0
    %324 = vmatpush1.msra.mxu0 %v229
    %325 = vmatprep.subr.mxu0 0.0
    %326 = vmatpush1.msra.mxu0 %v230
    %327 = vmatprep.subr.mxu0 0.0
    %328 = vmatpush1.msra.mxu0 %v231
    %329 = vmatprep.subr.mxu0 0.0
    %330 = vmatpush1.msra.mxu0 0.0
    %331 = vmatprep.subr.mxu0 0.0
    %332 = vmatpush1.msra.mxu0 0.0
    %333 = vmatprep.subr.mxu0 0.0
    %334 = vmatpush1.msra.mxu0 0.0
    %335 = vmatprep.subr.mxu0 0.0
    %336 = vmatpush1.msra.mxu0 0.0
    %337 = vmatprep.subr.mxu0 0.0
    %338 = vmatpush1.msra.mxu0 0.0
    %339 = vmatprep.subr.mxu0 0.0
    %340 = vmatpush1.msra.mxu0 0.0
    %341 = vmatprep.subr.mxu0 0.0
    %342 = vmatpush1.msra.mxu0 0.0
    %343 = vmatprep.subr.mxu0 0.0
    %344 = vmatpush1.msra.mxu0 0.0
    %345 = vmatprep.subr.mxu0 0.0
    %346 = vmatpush1.msra.mxu0 0.0
    %347 = vmatprep.subr.mxu0 0.0
    %348 = vmatpush1.msra.mxu0 0.0
    %349 = vmatprep.subr.mxu0 0.0
    %350 = vmatpush1.msra.mxu0 0.0
    %351 = vmatprep.subr.mxu0 0.0
    %352 = vmatpush1.msra.mxu0 0.0
    %353 = vmatprep.subr.mxu0 0.0
    %354 = vmatpush1.msra.mxu0 0.0
    %355 = vmatprep.subr.mxu0 0.0
    %356 = vmatpush1.msra.mxu0 0.0
    %357 = vmatprep.subr.mxu0 0.0
    %358 = vmatpush1.msra.mxu0 0.0
    %359 = vmatprep.subr.mxu0 0.0
    %360 = vmatpush1.msra.mxu0 0.0
    %361 = vmatprep.subr.mxu0 0.0
    %362 = vmatpush1.msra.mxu0 0.0
    %363 = vmatprep.subr.mxu0 0.0
    %364 = vmatpush1.msra.mxu0 0.0
    %365 = vmatprep.subr.mxu0 0.0
    %366 = vmatpush1.msra.mxu0 0.0
    %367 = vmatprep.subr.mxu0 0.0
    %368 = vmatpush1.msra.mxu0 0.0
    %369 = vmatprep.mubr.f32.mxu0 0.0
    %370 = vmatmul.mubr.f32.gmra.mrb[0].mxu0 %v282
    %v371 = vpop.f32.mrb[0].mxu0
    %v372 = vadd.f32 %v243, %v371
    %v373 = vpop.f32.mrb[0].mxu0
    %374 = vmatprep.mubr.f32.mxu0 0.0
    %375 = vmatmul.mubr.f32.gmra.mrb[0].mxu0 %v285
    %v376 = vpop.f32.mrb[0].mxu0
    %v377 = vadd.f32 %v248, %v376
    %v378 = vpop.f32.mrb[0].mxu0
    %379 = vmatprep.mubr.f32.mxu0 0.0
    %380 = vmatmul.mubr.f32.gmra.mrb[0].mxu0 %v288
    %v381 = vpop.f32.mrb[0].mxu0
    %v382 = vadd.f32 %v253, %v381
    %v383 = vpop.f32.mrb[0].mxu0
    %384 = vmatprep.mubr.f32.mxu0 0.0
    %385 = vmatmul.mubr.f32.gmra.mrb[0].mxu0 %v291
    %v386 = vpop.f32.mrb[0].mxu0
    %v387 = vadd.f32 %v258, %v386
    %v388 = vpop.f32.mrb[0].mxu0
    %389 = vmatprep.mubr.f32.mxu0 0.0
    %390 = vmatmul.mubr.f32.gmra.mrb[0].mxu0 %v294
    %v391 = vpop.f32.mrb[0].mxu0
    %v392 = vadd.f32 %v263, %v391
    %v393 = vpop.f32.mrb[0].mxu0
    %394 = vmatprep.mubr.f32.mxu0 0.0
    %395 = vmatmul.mubr.f32.gmra.mrb[0].mxu0 %v297
    %v396 = vpop.f32.mrb[0].mxu0
    %v397 = vadd.f32 %v268, %v396
    %v398 = vpop.f32.mrb[0].mxu0
    %399 = vmatprep.mubr.f32.mxu0 0.0
    %400 = vmatmul.mubr.f32.gmra.mrb[0].mxu0 %v300
    %v401 = vpop.f32.mrb[0].mxu0
    %v402 = vadd.f32 %v273, %v401
    %v403 = vpop.f32.mrb[0].mxu0
    %404 = vmatprep.mubr.f32.mxu0 0.0
    %405 = vmatmul.mubr.f32.gmra.mrb[0].mxu0 %v303
    %v406 = vpop.f32.mrb[0].mxu0
    %v407 = vadd.f32 %v278, %v406
    %v408 = vpop.f32.mrb[0].mxu0
    %409 = vdwg.mxu0
    %v410 = vld [vmem:[%s1] sm:$0xff]
    %v411 = vld [vmem:[%s1 + $0x8] sm:$0xff]
    %v412 = vld [vmem:[%s1 + $0x10] sm:$0xff]
    %v413 = vld [vmem:[%s1 + $0x18] sm:$0xff]
    %v414 = vld [vmem:[%s1 + $0x20] sm:$0xff]
    %v415 = vld [vmem:[%s1 + $0x28] sm:$0xff]
    %v416 = vld [vmem:[%s1 + $0x30] sm:$0xff]
    %v417 = vld [vmem:[%s1 + $0x38] sm:$0xff]
    %419 = vset.pattern.permute.xlu0 0
    %420 = vperm.xlu0 %419, %v410
    %v421 = vpop.permute.xlu0 %420
    %424 = vset.pattern.permute.xlu0 0
    %425 = vperm.xlu0 %424, %v411
    %v426 = vpop.permute.xlu0 %425
    %429 = vset.pattern.permute.xlu0 0
    %430 = vperm.xlu0 %429, %v412
    %v431 = vpop.permute.xlu0 %430
    %434 = vset.pattern.permute.xlu0 0
    %435 = vperm.xlu0 %434, %v413
    %v436 = vpop.permute.xlu0 %435
    %439 = vset.pattern.permute.xlu0 0
    %440 = vperm.xlu0 %439, %v414
    %v441 = vpop.permute.xlu0 %440
    %444 = vset.pattern.permute.xlu0 0
    %445 = vperm.xlu0 %444, %v415
    %v446 = vpop.permute.xlu0 %445
    %449 = vset.pattern.permute.xlu0 0
    %450 = vperm.xlu0 %449, %v416
    %v451 = vpop.permute.xlu0 %450
    %454 = vset.pattern.permute.xlu0 0
    %455 = vperm.xlu0 %454, %v417
    %v456 = vpop.permute.xlu0 %455
    %v458 = vadd.f32 %v372, %v421
    %v459 = vadd.f32 %v377, %v426
    %v460 = vadd.f32 %v382, %v431
    %v461 = vadd.f32 %v387, %v436
    %v462 = vadd.f32 %v392, %v441
    %v463 = vadd.f32 %v397, %v446
    %v464 = vadd.f32 %v402, %v451
    %v465 = vadd.f32 %v407, %v456
    %v466 = vld [vmem:[%s7] sm:$0xff]
    %v467 = vld [vmem:[%s7 + $0x8] sm:$0xff]
    %v468 = vld [vmem:[%s7 + $0x10] sm:$0xff]
    %v469 = vld [vmem:[%s7 + $0x18] sm:$0xff]
    %v470 = vld [vmem:[%s7 + $0x20] sm:$0xff]
    %v471 = vld [vmem:[%s7 + $0x28] sm:$0xff]
    %v472 = vld [vmem:[%s7 + $0x30] sm:$0xff]
    %v473 = vld [vmem:[%s7 + $0x38] sm:$0xff]
    %v474 = vld [vmem:[%s8] sm:$0xff]
    %v475 = vld [vmem:[%s8 + $0x8] sm:$0xff]
    %v476 = vld [vmem:[%s8 + $0x10] sm:$0xff]
    %v477 = vld [vmem:[%s8 + $0x18] sm:$0xff]
    %v478 = vld [vmem:[%s8 + $0x20] sm:$0xff]
    %v479 = vld [vmem:[%s8 + $0x28] sm:$0xff]
    %v480 = vld [vmem:[%s8 + $0x30] sm:$0xff]
    %v481 = vld [vmem:[%s8 + $0x38] sm:$0xff]
    %482 = vadd.xlane.f32.xlu0 %v458
    %v483 = vpop.xlane.xlu0 %482
    %484 = vadd.xlane.f32.xlu0 %v459
    %v485 = vpop.xlane.xlu0 %484
    %486 = vadd.xlane.f32.xlu0 %v460
    %v487 = vpop.xlane.xlu0 %486
    %488 = vadd.xlane.f32.xlu0 %v461
    %v489 = vpop.xlane.xlu0 %488
    %490 = vadd.xlane.f32.xlu0 %v462
    %v491 = vpop.xlane.xlu0 %490
    %492 = vadd.xlane.f32.xlu0 %v463
    %v493 = vpop.xlane.xlu0 %492
    %494 = vadd.xlane.f32.xlu0 %v464
    %v495 = vpop.xlane.xlu0 %494
    %496 = vadd.xlane.f32.xlu0 %v465
    %v497 = vpop.xlane.xlu0 %496
    %v498 = vmul.f32 %v458, %v458
    %v499 = vmul.f32 %v459, %v459
    %v500 = vmul.f32 %v460, %v460
    %v501 = vmul.f32 %v461, %v461
    %v502 = vmul.f32 %v462, %v462
    %v503 = vmul.f32 %v463, %v463
    %v504 = vmul.f32 %v464, %v464
    %v505 = vmul.f32 %v465, %v465
    %506 = vadd.xlane.f32.xlu0 %v498
    %v507 = vpop.xlane.xlu0 %506
    %508 = vadd.xlane.f32.xlu0 %v499
    %v509 = vpop.xlane.xlu0 %508
    %510 = vadd.xlane.f32.xlu0 %v500
    %v511 = vpop.xlane.xlu0 %510
    %512 = vadd.xlane.f32.xlu0 %v501
    %v513 = vpop.xlane.xlu0 %512
    %514 = vadd.xlane.f32.xlu0 %v502
    %v515 = vpop.xlane.xlu0 %514
    %516 = vadd.xlane.f32.xlu0 %v503
    %v517 = vpop.xlane.xlu0 %516
    %518 = vadd.xlane.f32.xlu0 %v504
    %v519 = vpop.xlane.xlu0 %518
    %520 = vadd.xlane.f32.xlu0 %v505
    %v521 = vpop.xlane.xlu0 %520
    %vm522 = vcmask 7168
    %v523 = vsel %vm522, %v483, %v507
    %v524 = vsel %vm522, %v485, %v509
    %v525 = vsel %vm522, %v487, %v511
    %v526 = vsel %vm522, %v489, %v513
    %v527 = vsel %vm522, %v491, %v515
    %v528 = vsel %vm522, %v493, %v517
    %v529 = vsel %vm522, %v495, %v519
    %v530 = vsel %vm522, %v497, %v521
    %v531 = vld [vmem:[%s9] sm:$0xff]
    %v532 = vld [vmem:[%s9 + $0x8] sm:$0xff]
    %v533 = vld [vmem:[%s9 + $0x10] sm:$0xff]
    %v534 = vld [vmem:[%s9 + $0x18] sm:$0xff]
    %v535 = vld [vmem:[%s9 + $0x20] sm:$0xff]
    %v536 = vld [vmem:[%s9 + $0x28] sm:$0xff]
    %v537 = vld [vmem:[%s9 + $0x30] sm:$0xff]
    %v538 = vld [vmem:[%s9 + $0x38] sm:$0xff]
    %vm539 = vcmask 523264
    %v541 = vsel %vm539, %v531, 0
    %v544 = vsel %vm539, %v532, 0
    %v547 = vsel %vm539, %v533, 0
    %v550 = vsel %vm539, %v534, 0
    %v553 = vsel %vm539, %v535, 0
    %v556 = vsel %vm539, %v536, 0
    %v559 = vsel %vm539, %v537, 0
    %v562 = vsel %vm539, %v538, 0
    %564 = vmatprep.subr.mxu0 0.0
    %565 = vmatpush1.msra.mxu0 %v523
    %566 = vmatprep.subr.mxu0 0.0
    %567 = vmatpush1.msra.mxu0 %v524
    %568 = vmatprep.subr.mxu0 0.0
    %569 = vmatpush1.msra.mxu0 %v525
    %570 = vmatprep.subr.mxu0 0.0
    %571 = vmatpush1.msra.mxu0 %v526
    %572 = vmatprep.subr.mxu0 0.0
    %573 = vmatpush1.msra.mxu0 %v527
    %574 = vmatprep.subr.mxu0 0.0
    %575 = vmatpush1.msra.mxu0 %v528
    %576 = vmatprep.subr.mxu0 0.0
    %577 = vmatpush1.msra.mxu0 %v529
    %578 = vmatprep.subr.mxu0 0.0
    %579 = vmatpush1.msra.mxu0 %v530
    %580 = vmatprep.subr.mxu0 0.0
    %581 = vmatpush1.msra.mxu0 0.0
    %582 = vmatprep.subr.mxu0 0.0
    %583 = vmatpush1.msra.mxu0 0.0
    %584 = vmatprep.subr.mxu0 0.0
    %585 = vmatpush1.msra.mxu0 0.0
    %586 = vmatprep.subr.mxu0 0.0
    %587 = vmatpush1.msra.mxu0 0.0
    %588 = vmatprep.subr.mxu0 0.0
    %589 = vmatpush1.msra.mxu0 0.0
    %590 = vmatprep.subr.mxu0 0.0
    %591 = vmatpush1.msra.mxu0 0.0
    %592 = vmatprep.subr.mxu0 0.0
    %593 = vmatpush1.msra.mxu0 0.0
    %594 = vmatprep.subr.mxu0 0.0
    %595 = vmatpush1.msra.mxu0 0.0
    %596 = vmatprep.subr.mxu0 0.0
    %597 = vmatpush1.msra.mxu0 0.0
    %598 = vmatprep.subr.mxu0 0.0
    %599 = vmatpush1.msra.mxu0 0.0
    %600 = vmatprep.subr.mxu0 0.0
    %601 = vmatpush1.msra.mxu0 0.0
    %602 = vmatprep.subr.mxu0 0.0
    %603 = vmatpush1.msra.mxu0 0.0
    %604 = vmatprep.subr.mxu0 0.0
    %605 = vmatpush1.msra.mxu0 0.0
    %606 = vmatprep.subr.mxu0 0.0
    %607 = vmatpush1.msra.mxu0 0.0
    %608 = vmatprep.subr.mxu0 0.0
    %609 = vmatpush1.msra.mxu0 0.0
    %610 = vmatprep.subr.mxu0 0.0
    %611 = vmatpush1.msra.mxu0 0.0
    %612 = vmatprep.subr.mxu0 0.0
    %613 = vmatpush1.msra.mxu0 0.0
    %614 = vmatprep.subr.mxu0 0.0
    %615 = vmatpush1.msra.mxu0 0.0
    %616 = vmatprep.subr.mxu0 0.0
    %617 = vmatpush1.msra.mxu0 0.0
    %618 = vmatprep.subr.mxu0 0.0
    %619 = vmatpush1.msra.mxu0 0.0
    %620 = vmatprep.subr.mxu0 0.0
    %621 = vmatpush1.msra.mxu0 0.0
    %622 = vmatprep.subr.mxu0 0.0
    %623 = vmatpush1.msra.mxu0 0.0
    %624 = vmatprep.subr.mxu0 0.0
    %625 = vmatpush1.msra.mxu0 0.0
    %626 = vmatprep.subr.mxu0 0.0
    %627 = vmatpush1.msra.mxu0 0.0
    %628 = vmatprep.mubr.f32.mxu0 0.0
    %629 = vmatmul.mubr.f32.gmra.mrb[0].mxu0 %v541
    %v630 = vpop.f32.mrb[0].mxu0
    %v631 = vadd.f32 0.0, %v630
    %v632 = vpop.f32.mrb[0].mxu0
    %633 = vmatprep.mubr.f32.mxu0 0.0
    %634 = vmatmul.mubr.f32.gmra.mrb[0].mxu0 %v544
    %v635 = vpop.f32.mrb[0].mxu0
    %v636 = vadd.f32 0.0, %v635
    %v637 = vpop.f32.mrb[0].mxu0
    %638 = vmatprep.mubr.f32.mxu0 0.0
    %639 = vmatmul.mubr.f32.gmra.mrb[0].mxu0 %v547
    %v640 = vpop.f32.mrb[0].mxu0
    %v641 = vadd.f32 0.0, %v640
    %v642 = vpop.f32.mrb[0].mxu0
    %643 = vmatprep.mubr.f32.mxu0 0.0
    %644 = vmatmul.mubr.f32.gmra.mrb[0].mxu0 %v550
    %v645 = vpop.f32.mrb[0].mxu0
    %v646 = vadd.f32 0.0, %v645
    %v647 = vpop.f32.mrb[0].mxu0
    %648 = vmatprep.mubr.f32.mxu0 0.0
    %649 = vmatmul.mubr.f32.gmra.mrb[0].mxu0 %v553
    %v650 = vpop.f32.mrb[0].mxu0
    %v651 = vadd.f32 0.0, %v650
    %v652 = vpop.f32.mrb[0].mxu0
    %653 = vmatprep.mubr.f32.mxu0 0.0
    %654 = vmatmul.mubr.f32.gmra.mrb[0].mxu0 %v556
    %v655 = vpop.f32.mrb[0].mxu0
    %v656 = vadd.f32 0.0, %v655
    %v657 = vpop.f32.mrb[0].mxu0
    %658 = vmatprep.mubr.f32.mxu0 0.0
    %659 = vmatmul.mubr.f32.gmra.mrb[0].mxu0 %v559
    %v660 = vpop.f32.mrb[0].mxu0
    %v661 = vadd.f32 0.0, %v660
    %v662 = vpop.f32.mrb[0].mxu0
    %663 = vmatprep.mubr.f32.mxu0 0.0
    %664 = vmatmul.mubr.f32.gmra.mrb[0].mxu0 %v562
    %v665 = vpop.f32.mrb[0].mxu0
    %v666 = vadd.f32 0.0, %v665
    %v667 = vpop.f32.mrb[0].mxu0
    %668 = vdwg.mxu0
    %v669 = vmul.f32 %v631, 0.00390625
    %v670 = vmul.f32 %v636, 0.00390625
    %v671 = vmul.f32 %v641, 0.00390625
    %v672 = vmul.f32 %v646, 0.00390625
    %v673 = vmul.f32 %v651, 0.00390625
    %v674 = vmul.f32 %v656, 0.00390625
    %v675 = vmul.f32 %v661, 0.00390625
    %v676 = vmul.f32 %v666, 0.00390625
    %v677 = vmul.f32 %v669, %v669
    %v678 = vmul.f32 %v670, %v670
    %v679 = vmul.f32 %v671, %v671
    %v680 = vmul.f32 %v672, %v672
    %v681 = vmul.f32 %v673, %v673
    %v682 = vmul.f32 %v674, %v674
    %v683 = vmul.f32 %v675, %v675
    %v684 = vmul.f32 %v676, %v676
    %693 = vrot.lane.b32.xlu0 %v677, 1
    %v694 = vpop.permute.xlu0 %693
    %695 = vrot.lane.b32.xlu0 %v678, 1
    %v696 = vpop.permute.xlu0 %695
    %697 = vrot.lane.b32.xlu0 %v679, 1
    %v698 = vpop.permute.xlu0 %697
    %699 = vrot.lane.b32.xlu0 %v680, 1
    %v700 = vpop.permute.xlu0 %699
    %701 = vrot.lane.b32.xlu0 %v681, 1
    %v702 = vpop.permute.xlu0 %701
    %703 = vrot.lane.b32.xlu0 %v682, 1
    %v704 = vpop.permute.xlu0 %703
    %705 = vrot.lane.b32.xlu0 %v683, 1
    %v706 = vpop.permute.xlu0 %705
    %707 = vrot.lane.b32.xlu0 %v684, 1
    %v708 = vpop.permute.xlu0 %707
    %v717 = vsub.f32 %v669, %v694
    %v718 = vsub.f32 %v670, %v696
    %v719 = vsub.f32 %v671, %v698
    %v720 = vsub.f32 %v672, %v700
    %v721 = vsub.f32 %v673, %v702
    %v722 = vsub.f32 %v674, %v704
    %v723 = vsub.f32 %v675, %v706
    %v724 = vsub.f32 %v676, %v708
    %v725 = vmax.f32 %v717, 0.0
    %v726 = vmax.f32 %v718, 0.0
    %v727 = vmax.f32 %v719, 0.0
    %v728 = vmax.f32 %v720, 0.0
    %v729 = vmax.f32 %v721, 0.0
    %v730 = vmax.f32 %v722, 0.0
    %v731 = vmax.f32 %v723, 0.0
    %v732 = vmax.f32 %v724, 0.0
    %734 = vset.pattern.permute.xlu0 0
    %735 = vperm.xlu0 %734, %v669
    %v736 = vpop.permute.xlu0 %735
    %739 = vset.pattern.permute.xlu0 0
    %740 = vperm.xlu0 %739, %v670
    %v741 = vpop.permute.xlu0 %740
    %744 = vset.pattern.permute.xlu0 0
    %745 = vperm.xlu0 %744, %v671
    %v746 = vpop.permute.xlu0 %745
    %749 = vset.pattern.permute.xlu0 0
    %750 = vperm.xlu0 %749, %v672
    %v751 = vpop.permute.xlu0 %750
    %754 = vset.pattern.permute.xlu0 0
    %755 = vperm.xlu0 %754, %v673
    %v756 = vpop.permute.xlu0 %755
    %759 = vset.pattern.permute.xlu0 0
    %760 = vperm.xlu0 %759, %v674
    %v761 = vpop.permute.xlu0 %760
    %764 = vset.pattern.permute.xlu0 0
    %765 = vperm.xlu0 %764, %v675
    %v766 = vpop.permute.xlu0 %765
    %769 = vset.pattern.permute.xlu0 0
    %770 = vperm.xlu0 %769, %v676
    %v771 = vpop.permute.xlu0 %770
    %v773 = vsub.f32 %v458, %v736
    %v774 = vsub.f32 %v459, %v741
    %v775 = vsub.f32 %v460, %v746
    %v776 = vsub.f32 %v461, %v751
    %v777 = vsub.f32 %v462, %v756
    %v778 = vsub.f32 %v463, %v761
    %v779 = vsub.f32 %v464, %v766
    %v780 = vsub.f32 %v465, %v771
    %v781 = vadd.f32 %v725, 1e-06
    %v782 = vadd.f32 %v726, 1e-06
    %v783 = vadd.f32 %v727, 1e-06
    %v784 = vadd.f32 %v728, 1e-06
    %v785 = vadd.f32 %v729, 1e-06
    %v786 = vadd.f32 %v730, 1e-06
    %v787 = vadd.f32 %v731, 1e-06
    %v788 = vadd.f32 %v732, 1e-06
    %v789 = vrsqrt.pop %v781
    %v790 = vrsqrt.pop %v782
    %v791 = vrsqrt.pop %v783
    %v792 = vrsqrt.pop %v784
    %v793 = vrsqrt.pop %v785
    %v794 = vrsqrt.pop %v786
    %v795 = vrsqrt.pop %v787
    %v796 = vrsqrt.pop %v788
    %798 = vset.pattern.permute.xlu0 1
    %799 = vperm.xlu0 %798, %v789
    %v800 = vpop.permute.xlu0 %799
    %803 = vset.pattern.permute.xlu0 1
    %804 = vperm.xlu0 %803, %v790
    %v805 = vpop.permute.xlu0 %804
    %808 = vset.pattern.permute.xlu0 1
    %809 = vperm.xlu0 %808, %v791
    %v810 = vpop.permute.xlu0 %809
    %813 = vset.pattern.permute.xlu0 1
    %814 = vperm.xlu0 %813, %v792
    %v815 = vpop.permute.xlu0 %814
    %818 = vset.pattern.permute.xlu0 1
    %819 = vperm.xlu0 %818, %v793
    %v820 = vpop.permute.xlu0 %819
    %823 = vset.pattern.permute.xlu0 1
    %824 = vperm.xlu0 %823, %v794
    %v825 = vpop.permute.xlu0 %824
    %828 = vset.pattern.permute.xlu0 1
    %829 = vperm.xlu0 %828, %v795
    %v830 = vpop.permute.xlu0 %829
    %833 = vset.pattern.permute.xlu0 1
    %834 = vperm.xlu0 %833, %v796
    %v835 = vpop.permute.xlu0 %834
    %v837 = vmul.f32 %v773, %v800
    %v838 = vmul.f32 %v774, %v805
    %v839 = vmul.f32 %v775, %v810
    %v840 = vmul.f32 %v776, %v815
    %v841 = vmul.f32 %v777, %v820
    %v842 = vmul.f32 %v778, %v825
    %v843 = vmul.f32 %v779, %v830
    %v844 = vmul.f32 %v780, %v835
    %846 = vset.pattern.permute.xlu0 0
    %847 = vperm.xlu0 %846, %v466
    %v848 = vpop.permute.xlu0 %847
    %851 = vset.pattern.permute.xlu0 0
    %852 = vperm.xlu0 %851, %v467
    %v853 = vpop.permute.xlu0 %852
    %856 = vset.pattern.permute.xlu0 0
    %857 = vperm.xlu0 %856, %v468
    %v858 = vpop.permute.xlu0 %857
    %861 = vset.pattern.permute.xlu0 0
    %862 = vperm.xlu0 %861, %v469
    %v863 = vpop.permute.xlu0 %862
    %866 = vset.pattern.permute.xlu0 0
    %867 = vperm.xlu0 %866, %v470
    %v868 = vpop.permute.xlu0 %867
    %871 = vset.pattern.permute.xlu0 0
    %872 = vperm.xlu0 %871, %v471
    %v873 = vpop.permute.xlu0 %872
    %876 = vset.pattern.permute.xlu0 0
    %877 = vperm.xlu0 %876, %v472
    %v878 = vpop.permute.xlu0 %877
    %881 = vset.pattern.permute.xlu0 0
    %882 = vperm.xlu0 %881, %v473
    %v883 = vpop.permute.xlu0 %882
    %v885 = vmul.f32 %v837, %v848
    %v886 = vmul.f32 %v838, %v853
    %v887 = vmul.f32 %v839, %v858
    %v888 = vmul.f32 %v840, %v863
    %v889 = vmul.f32 %v841, %v868
    %v890 = vmul.f32 %v842, %v873
    %v891 = vmul.f32 %v843, %v878
    %v892 = vmul.f32 %v844, %v883
    %894 = vset.pattern.permute.xlu0 0
    %895 = vperm.xlu0 %894, %v474
    %v896 = vpop.permute.xlu0 %895
    %899 = vset.pattern.permute.xlu0 0
    %900 = vperm.xlu0 %899, %v475
    %v901 = vpop.permute.xlu0 %900
    %904 = vset.pattern.permute.xlu0 0
    %905 = vperm.xlu0 %904, %v476
    %v906 = vpop.permute.xlu0 %905
    %909 = vset.pattern.permute.xlu0 0
    %910 = vperm.xlu0 %909, %v477
    %v911 = vpop.permute.xlu0 %910
    %914 = vset.pattern.permute.xlu0 0
    %915 = vperm.xlu0 %914, %v478
    %v916 = vpop.permute.xlu0 %915
    %919 = vset.pattern.permute.xlu0 0
    %920 = vperm.xlu0 %919, %v479
    %v921 = vpop.permute.xlu0 %920
    %924 = vset.pattern.permute.xlu0 0
    %925 = vperm.xlu0 %924, %v480
    %v926 = vpop.permute.xlu0 %925
    %929 = vset.pattern.permute.xlu0 0
    %930 = vperm.xlu0 %929, %v481
    %v931 = vpop.permute.xlu0 %930
    %v933 = vadd.f32 %v885, %v896
    %v934 = vadd.f32 %v886, %v901
    %v935 = vadd.f32 %v887, %v906
    %v936 = vadd.f32 %v888, %v911
    %v937 = vadd.f32 %v889, %v916
    %v938 = vadd.f32 %v890, %v921
    %v939 = vadd.f32 %v891, %v926
    %v940 = vadd.f32 %v892, %v931
    %v941 = vxor.u32 %v933, 2147483648
    %v942 = vxor.u32 %v934, 2147483648
    %v943 = vxor.u32 %v935, 2147483648
    %v944 = vxor.u32 %v936, 2147483648
    %v945 = vxor.u32 %v937, 2147483648
    %v946 = vxor.u32 %v938, 2147483648
    %v947 = vxor.u32 %v939, 2147483648
    %v948 = vxor.u32 %v940, 2147483648
    %v949 = vmul.f32 %v941, 1.442695
    %v950 = vpow.pop %v949
    %v951 = vmul.f32 %v942, 1.442695
    %v952 = vpow.pop %v951
    %v953 = vmul.f32 %v943, 1.442695
    %v954 = vpow.pop %v953
    %v955 = vmul.f32 %v944, 1.442695
    %v956 = vpow.pop %v955
    %v957 = vmul.f32 %v945, 1.442695
    %v958 = vpow.pop %v957
    %v959 = vmul.f32 %v946, 1.442695
    %v960 = vpow.pop %v959
    %v961 = vmul.f32 %v947, 1.442695
    %v962 = vpow.pop %v961
    %v963 = vmul.f32 %v948, 1.442695
    %v964 = vpow.pop %v963
    %v965 = vadd.f32 %v950, 1.0
    %v966 = vadd.f32 %v952, 1.0
    %v967 = vadd.f32 %v954, 1.0
    %v968 = vadd.f32 %v956, 1.0
    %v969 = vadd.f32 %v958, 1.0
    %v970 = vadd.f32 %v960, 1.0
    %v971 = vadd.f32 %v962, 1.0
    %v972 = vadd.f32 %v964, 1.0
    %v973 = vrcp.pop %v965
    %v974 = vmul.f32 1.0, %v973
    %v975 = vrcp.pop %v966
    %v976 = vmul.f32 1.0, %v975
    %v977 = vrcp.pop %v967
    %v978 = vmul.f32 1.0, %v977
    %v979 = vrcp.pop %v968
    %v980 = vmul.f32 1.0, %v979
    %v981 = vrcp.pop %v969
    %v982 = vmul.f32 1.0, %v981
    %v983 = vrcp.pop %v970
    %v984 = vmul.f32 1.0, %v983
    %v985 = vrcp.pop %v971
    %v986 = vmul.f32 1.0, %v985
    %v987 = vrcp.pop %v972
    %v988 = vmul.f32 1.0, %v987
    %v989 = vmul.f32 %v933, %v974
    %v990 = vmul.f32 %v934, %v976
    %v991 = vmul.f32 %v935, %v978
    %v992 = vmul.f32 %v936, %v980
    %v993 = vmul.f32 %v937, %v982
    %v994 = vmul.f32 %v938, %v984
    %v995 = vmul.f32 %v939, %v986
    %v996 = vmul.f32 %v940, %v988
    %v997 = vld [vmem:[%s11] sm:$0xff]
    %v998 = vld [vmem:[%s11 + $0x8] sm:$0xff]
    %v999 = vld [vmem:[%s11 + $0x10] sm:$0xff]
    %v1000 = vld [vmem:[%s11 + $0x18] sm:$0xff]
    %v1001 = vld [vmem:[%s11 + $0x20] sm:$0xff]
    %v1002 = vld [vmem:[%s11 + $0x28] sm:$0xff]
    %v1003 = vld [vmem:[%s11 + $0x30] sm:$0xff]
    %v1004 = vld [vmem:[%s11 + $0x38] sm:$0xff]
    %1005 = vrot.lane.b32.xlu0 %v989, 1
    %v1006 = vpop.permute.xlu0 %1005
    %1007 = vrot.lane.b32.xlu0 %v990, 1
    %v1008 = vpop.permute.xlu0 %1007
    %1009 = vrot.lane.b32.xlu0 %v991, 1
    %v1010 = vpop.permute.xlu0 %1009
    %1011 = vrot.lane.b32.xlu0 %v992, 1
    %v1012 = vpop.permute.xlu0 %1011
    %1013 = vrot.lane.b32.xlu0 %v993, 1
    %v1014 = vpop.permute.xlu0 %1013
    %1015 = vrot.lane.b32.xlu0 %v994, 1
    %v1016 = vpop.permute.xlu0 %1015
    %1017 = vrot.lane.b32.xlu0 %v995, 1
    %v1018 = vpop.permute.xlu0 %1017
    %1019 = vrot.lane.b32.xlu0 %v996, 1
    %v1020 = vpop.permute.xlu0 %1019
    %v1021 = vsel %vm213, 0.0, %v1006
    %v1022 = vsel %vm213, 0.0, %v1008
    %v1023 = vsel %vm213, 0.0, %v1010
    %v1024 = vsel %vm213, 0.0, %v1012
    %v1025 = vsel %vm213, 0.0, %v1014
    %v1026 = vsel %vm213, 0.0, %v1016
    %v1027 = vsel %vm213, 0.0, %v1018
    %v1028 = vsel %vm213, 0.0, %v1020
    %1029 = vrot.lane.b32.xlu0 %v989, 127
    %v1030 = vpop.permute.xlu0 %1029
    %1031 = vrot.lane.b32.xlu0 %v990, 127
    %v1032 = vpop.permute.xlu0 %1031
    %1033 = vrot.lane.b32.xlu0 %v991, 127
    %v1034 = vpop.permute.xlu0 %1033
    %1035 = vrot.lane.b32.xlu0 %v992, 127
    %v1036 = vpop.permute.xlu0 %1035
    %1037 = vrot.lane.b32.xlu0 %v993, 127
    %v1038 = vpop.permute.xlu0 %1037
    %1039 = vrot.lane.b32.xlu0 %v994, 127
    %v1040 = vpop.permute.xlu0 %1039
    %1041 = vrot.lane.b32.xlu0 %v995, 127
    %v1042 = vpop.permute.xlu0 %1041
    %1043 = vrot.lane.b32.xlu0 %v996, 127
    %v1044 = vpop.permute.xlu0 %1043
    %v1045 = vsel %vm227, 0.0, %v1030
    %v1046 = vsel %vm227, 0.0, %v1032
    %v1047 = vsel %vm227, 0.0, %v1034
    %v1048 = vsel %vm227, 0.0, %v1036
    %v1049 = vsel %vm227, 0.0, %v1038
    %v1050 = vsel %vm227, 0.0, %v1040
    %v1051 = vsel %vm227, 0.0, %v1042
    %v1052 = vsel %vm227, 0.0, %v1044
    %v1053 = vld [vmem:[%s10] sm:$0xff]
    %v1054 = vld [vmem:[%s10 + $0x8] sm:$0xff]
    %v1055 = vld [vmem:[%s10 + $0x10] sm:$0xff]
    %v1056 = vld [vmem:[%s10 + $0x18] sm:$0xff]
    %v1057 = vld [vmem:[%s10 + $0x20] sm:$0xff]
    %v1058 = vld [vmem:[%s10 + $0x28] sm:$0xff]
    %v1059 = vld [vmem:[%s10 + $0x30] sm:$0xff]
    %v1060 = vld [vmem:[%s10 + $0x38] sm:$0xff]
    %v1061 = vld [vmem:[%s10 + $0x40] sm:$0xff]
    %v1062 = vld [vmem:[%s10 + $0x48] sm:$0xff]
    %v1063 = vld [vmem:[%s10 + $0x50] sm:$0xff]
    %v1064 = vld [vmem:[%s10 + $0x58] sm:$0xff]
    %v1065 = vld [vmem:[%s10 + $0x60] sm:$0xff]
    %v1066 = vld [vmem:[%s10 + $0x68] sm:$0xff]
    %v1067 = vld [vmem:[%s10 + $0x70] sm:$0xff]
    %v1068 = vld [vmem:[%s10 + $0x78] sm:$0xff]
    %1070 = vset.pattern.permute.xlu0 0
    %1071 = vperm.xlu0 %1070, %v997
    %v1072 = vpop.permute.xlu0 %1071
    %1075 = vset.pattern.permute.xlu0 0
    %1076 = vperm.xlu0 %1075, %v998
    %v1077 = vpop.permute.xlu0 %1076
    %1080 = vset.pattern.permute.xlu0 0
    %1081 = vperm.xlu0 %1080, %v999
    %v1082 = vpop.permute.xlu0 %1081
    %1085 = vset.pattern.permute.xlu0 0
    %1086 = vperm.xlu0 %1085, %v1000
    %v1087 = vpop.permute.xlu0 %1086
    %1090 = vset.pattern.permute.xlu0 0
    %1091 = vperm.xlu0 %1090, %v1001
    %v1092 = vpop.permute.xlu0 %1091
    %1095 = vset.pattern.permute.xlu0 0
    %1096 = vperm.xlu0 %1095, %v1002
    %v1097 = vpop.permute.xlu0 %1096
    %1100 = vset.pattern.permute.xlu0 0
    %1101 = vperm.xlu0 %1100, %v1003
    %v1102 = vpop.permute.xlu0 %1101
    %1105 = vset.pattern.permute.xlu0 0
    %1106 = vperm.xlu0 %1105, %v1004
    %v1107 = vpop.permute.xlu0 %1106
    %v1110 = vsel %vm539, %v1054, 0
    %v1113 = vsel %vm539, %v1056, 0
    %v1116 = vsel %vm539, %v1058, 0
    %v1119 = vsel %vm539, %v1060, 0
    %v1122 = vsel %vm539, %v1062, 0
    %v1125 = vsel %vm539, %v1064, 0
    %v1128 = vsel %vm539, %v1066, 0
    %v1131 = vsel %vm539, %v1068, 0
    %1133 = vmatprep.subr.mxu0 0.0
    %1134 = vmatpush1.msra.mxu0 %v1021
    %1135 = vmatprep.subr.mxu0 0.0
    %1136 = vmatpush1.msra.mxu0 %v1022
    %1137 = vmatprep.subr.mxu0 0.0
    %1138 = vmatpush1.msra.mxu0 %v1023
    %1139 = vmatprep.subr.mxu0 0.0
    %1140 = vmatpush1.msra.mxu0 %v1024
    %1141 = vmatprep.subr.mxu0 0.0
    %1142 = vmatpush1.msra.mxu0 %v1025
    %1143 = vmatprep.subr.mxu0 0.0
    %1144 = vmatpush1.msra.mxu0 %v1026
    %1145 = vmatprep.subr.mxu0 0.0
    %1146 = vmatpush1.msra.mxu0 %v1027
    %1147 = vmatprep.subr.mxu0 0.0
    %1148 = vmatpush1.msra.mxu0 %v1028
    %1149 = vmatprep.subr.mxu0 0.0
    %1150 = vmatpush1.msra.mxu0 %v989
    %1151 = vmatprep.subr.mxu0 0.0
    %1152 = vmatpush1.msra.mxu0 %v990
    %1153 = vmatprep.subr.mxu0 0.0
    %1154 = vmatpush1.msra.mxu0 %v991
    %1155 = vmatprep.subr.mxu0 0.0
    %1156 = vmatpush1.msra.mxu0 %v992
    %1157 = vmatprep.subr.mxu0 0.0
    %1158 = vmatpush1.msra.mxu0 %v993
    %1159 = vmatprep.subr.mxu0 0.0
    %1160 = vmatpush1.msra.mxu0 %v994
    %1161 = vmatprep.subr.mxu0 0.0
    %1162 = vmatpush1.msra.mxu0 %v995
    %1163 = vmatprep.subr.mxu0 0.0
    %1164 = vmatpush1.msra.mxu0 %v996
    %1165 = vmatprep.subr.mxu0 0.0
    %1166 = vmatpush1.msra.mxu0 %v1045
    %1167 = vmatprep.subr.mxu0 0.0
    %1168 = vmatpush1.msra.mxu0 %v1046
    %1169 = vmatprep.subr.mxu0 0.0
    %1170 = vmatpush1.msra.mxu0 %v1047
    %1171 = vmatprep.subr.mxu0 0.0
    %1172 = vmatpush1.msra.mxu0 %v1048
    %1173 = vmatprep.subr.mxu0 0.0
    %1174 = vmatpush1.msra.mxu0 %v1049
    %1175 = vmatprep.subr.mxu0 0.0
    %1176 = vmatpush1.msra.mxu0 %v1050
    %1177 = vmatprep.subr.mxu0 0.0
    %1178 = vmatpush1.msra.mxu0 %v1051
    %1179 = vmatprep.subr.mxu0 0.0
    %1180 = vmatpush1.msra.mxu0 %v1052
    %1181 = vmatprep.subr.mxu0 0.0
    %1182 = vmatpush1.msra.mxu0 0.0
    %1183 = vmatprep.subr.mxu0 0.0
    %1184 = vmatpush1.msra.mxu0 0.0
    %1185 = vmatprep.subr.mxu0 0.0
    %1186 = vmatpush1.msra.mxu0 0.0
    %1187 = vmatprep.subr.mxu0 0.0
    %1188 = vmatpush1.msra.mxu0 0.0
    %1189 = vmatprep.subr.mxu0 0.0
    %1190 = vmatpush1.msra.mxu0 0.0
    %1191 = vmatprep.subr.mxu0 0.0
    %1192 = vmatpush1.msra.mxu0 0.0
    %1193 = vmatprep.subr.mxu0 0.0
    %1194 = vmatpush1.msra.mxu0 0.0
    %1195 = vmatprep.subr.mxu0 0.0
    %1196 = vmatpush1.msra.mxu0 0.0
    %1197 = vmatprep.mubr.f32.mxu0 %v1110
    %1198 = vmatmul.mubr.f32.gmra.mrb[0].mxu0 %v1053
    %v1199 = vpop.f32.mrb[0].mxu0
    %v1200 = vadd.f32 %v1072, %v1199
    %v1201 = vpop.f32.mrb[0].mxu0
    %1202 = vmatprep.mubr.f32.mxu0 %v1113
    %1203 = vmatmul.mubr.f32.gmra.mrb[0].mxu0 %v1055
    %v1204 = vpop.f32.mrb[0].mxu0
    %v1205 = vadd.f32 %v1077, %v1204
    %v1206 = vpop.f32.mrb[0].mxu0
    %1207 = vmatprep.mubr.f32.mxu0 %v1116
    %1208 = vmatmul.mubr.f32.gmra.mrb[0].mxu0 %v1057
    %v1209 = vpop.f32.mrb[0].mxu0
    %v1210 = vadd.f32 %v1082, %v1209
    %v1211 = vpop.f32.mrb[0].mxu0
    %1212 = vmatprep.mubr.f32.mxu0 %v1119
    %1213 = vmatmul.mubr.f32.gmra.mrb[0].mxu0 %v1059
    %v1214 = vpop.f32.mrb[0].mxu0
    %v1215 = vadd.f32 %v1087, %v1214
    %v1216 = vpop.f32.mrb[0].mxu0
    %1217 = vmatprep.mubr.f32.mxu0 %v1122
    %1218 = vmatmul.mubr.f32.gmra.mrb[0].mxu0 %v1061
    %v1219 = vpop.f32.mrb[0].mxu0
    %v1220 = vadd.f32 %v1092, %v1219
    %v1221 = vpop.f32.mrb[0].mxu0
    %1222 = vmatprep.mubr.f32.mxu0 %v1125
    %1223 = vmatmul.mubr.f32.gmra.mrb[0].mxu0 %v1063
    %v1224 = vpop.f32.mrb[0].mxu0
    %v1225 = vadd.f32 %v1097, %v1224
    %v1226 = vpop.f32.mrb[0].mxu0
    %1227 = vmatprep.mubr.f32.mxu0 %v1128
    %1228 = vmatmul.mubr.f32.gmra.mrb[0].mxu0 %v1065
    %v1229 = vpop.f32.mrb[0].mxu0
    %v1230 = vadd.f32 %v1102, %v1229
    %v1231 = vpop.f32.mrb[0].mxu0
    %1232 = vmatprep.mubr.f32.mxu0 %v1131
    %1233 = vmatmul.mubr.f32.gmra.mrb[0].mxu0 %v1067
    %v1234 = vpop.f32.mrb[0].mxu0
    %v1235 = vadd.f32 %v1107, %v1234
    %v1236 = vpop.f32.mrb[0].mxu0
    %1237 = vdwg.mxu0
    %v1238 = vld [vmem:[%s12] sm:$0xff]
    %v1239 = vld [vmem:[%s12 + $0x8] sm:$0xff]
    %v1240 = vld [vmem:[%s12 + $0x10] sm:$0xff]
    %v1241 = vld [vmem:[%s12 + $0x18] sm:$0xff]
    %v1242 = vld [vmem:[%s12 + $0x20] sm:$0xff]
    %v1243 = vld [vmem:[%s12 + $0x28] sm:$0xff]
    %v1244 = vld [vmem:[%s12 + $0x30] sm:$0xff]
    %v1245 = vld [vmem:[%s12 + $0x38] sm:$0xff]
    %v1246 = vld [vmem:[%s13] sm:$0xff]
    %v1247 = vld [vmem:[%s13 + $0x8] sm:$0xff]
    %v1248 = vld [vmem:[%s13 + $0x10] sm:$0xff]
    %v1249 = vld [vmem:[%s13 + $0x18] sm:$0xff]
    %v1250 = vld [vmem:[%s13 + $0x20] sm:$0xff]
    %v1251 = vld [vmem:[%s13 + $0x28] sm:$0xff]
    %v1252 = vld [vmem:[%s13 + $0x30] sm:$0xff]
    %v1253 = vld [vmem:[%s13 + $0x38] sm:$0xff]
    %1255 = vset.pattern.permute.xlu0 0
    %1256 = vperm.xlu0 %1255, %v1246
    %v1257 = vpop.permute.xlu0 %1256
    %1260 = vset.pattern.permute.xlu0 0
    %1261 = vperm.xlu0 %1260, %v1247
    %v1262 = vpop.permute.xlu0 %1261
    %1265 = vset.pattern.permute.xlu0 0
    %1266 = vperm.xlu0 %1265, %v1248
    %v1267 = vpop.permute.xlu0 %1266
    %1270 = vset.pattern.permute.xlu0 0
    %1271 = vperm.xlu0 %1270, %v1249
    %v1272 = vpop.permute.xlu0 %1271
    %1275 = vset.pattern.permute.xlu0 0
    %1276 = vperm.xlu0 %1275, %v1250
    %v1277 = vpop.permute.xlu0 %1276
    %1280 = vset.pattern.permute.xlu0 0
    %1281 = vperm.xlu0 %1280, %v1251
    %v1282 = vpop.permute.xlu0 %1281
    %1285 = vset.pattern.permute.xlu0 0
    %1286 = vperm.xlu0 %1285, %v1252
    %v1287 = vpop.permute.xlu0 %1286
    %1290 = vset.pattern.permute.xlu0 0
    %1291 = vperm.xlu0 %1290, %v1253
    %v1292 = vpop.permute.xlu0 %1291
    %vm1294 = vcmask 261120
    %v1296 = vsel %vm1294, %v1238, 0
    %v1299 = vsel %vm1294, %v1239, 0
    %v1302 = vsel %vm1294, %v1240, 0
    %v1305 = vsel %vm1294, %v1241, 0
    %v1308 = vsel %vm1294, %v1242, 0
    %v1311 = vsel %vm1294, %v1243, 0
    %v1314 = vsel %vm1294, %v1244, 0
    %v1317 = vsel %vm1294, %v1245, 0
    %1319 = vmatprep.subr.mxu0 0.0
    %1320 = vmatpush1.msra.mxu0 %v52
    %1321 = vmatprep.subr.mxu0 0.0
    %1322 = vmatpush1.msra.mxu0 %v53
    %1323 = vmatprep.subr.mxu0 0.0
    %1324 = vmatpush1.msra.mxu0 %v54
    %1325 = vmatprep.subr.mxu0 0.0
    %1326 = vmatpush1.msra.mxu0 %v55
    %1327 = vmatprep.subr.mxu0 0.0
    %1328 = vmatpush1.msra.mxu0 0.0
    %1329 = vmatprep.subr.mxu0 0.0
    %1330 = vmatpush1.msra.mxu0 0.0
    %1331 = vmatprep.subr.mxu0 0.0
    %1332 = vmatpush1.msra.mxu0 0.0
    %1333 = vmatprep.subr.mxu0 0.0
    %1334 = vmatpush1.msra.mxu0 0.0
    %1335 = vmatprep.subr.mxu0 0.0
    %1336 = vmatpush1.msra.mxu0 0.0
    %1337 = vmatprep.subr.mxu0 0.0
    %1338 = vmatpush1.msra.mxu0 0.0
    %1339 = vmatprep.subr.mxu0 0.0
    %1340 = vmatpush1.msra.mxu0 0.0
    %1341 = vmatprep.subr.mxu0 0.0
    %1342 = vmatpush1.msra.mxu0 0.0
    %1343 = vmatprep.subr.mxu0 0.0
    %1344 = vmatpush1.msra.mxu0 0.0
    %1345 = vmatprep.subr.mxu0 0.0
    %1346 = vmatpush1.msra.mxu0 0.0
    %1347 = vmatprep.subr.mxu0 0.0
    %1348 = vmatpush1.msra.mxu0 0.0
    %1349 = vmatprep.subr.mxu0 0.0
    %1350 = vmatpush1.msra.mxu0 0.0
    %1351 = vmatprep.subr.mxu0 0.0
    %1352 = vmatpush1.msra.mxu0 0.0
    %1353 = vmatprep.subr.mxu0 0.0
    %1354 = vmatpush1.msra.mxu0 0.0
    %1355 = vmatprep.subr.mxu0 0.0
    %1356 = vmatpush1.msra.mxu0 0.0
    %1357 = vmatprep.subr.mxu0 0.0
    %1358 = vmatpush1.msra.mxu0 0.0
    %1359 = vmatprep.subr.mxu0 0.0
    %1360 = vmatpush1.msra.mxu0 0.0
    %1361 = vmatprep.subr.mxu0 0.0
    %1362 = vmatpush1.msra.mxu0 0.0
    %1363 = vmatprep.subr.mxu0 0.0
    %1364 = vmatpush1.msra.mxu0 0.0
    %1365 = vmatprep.subr.mxu0 0.0
    %1366 = vmatpush1.msra.mxu0 0.0
    %1367 = vmatprep.subr.mxu0 0.0
    %1368 = vmatpush1.msra.mxu0 0.0
    %1369 = vmatprep.subr.mxu0 0.0
    %1370 = vmatpush1.msra.mxu0 0.0
    %1371 = vmatprep.subr.mxu0 0.0
    %1372 = vmatpush1.msra.mxu0 0.0
    %1373 = vmatprep.subr.mxu0 0.0
    %1374 = vmatpush1.msra.mxu0 0.0
    %1375 = vmatprep.subr.mxu0 0.0
    %1376 = vmatpush1.msra.mxu0 0.0
    %1377 = vmatprep.subr.mxu0 0.0
    %1378 = vmatpush1.msra.mxu0 0.0
    %1379 = vmatprep.subr.mxu0 0.0
    %1380 = vmatpush1.msra.mxu0 0.0
    %1381 = vmatprep.subr.mxu0 0.0
    %1382 = vmatpush1.msra.mxu0 0.0
    %1383 = vmatprep.mubr.f32.mxu0 0.0
    %1384 = vmatmul.mubr.f32.gmra.mrb[0].mxu0 %v1296
    %v1385 = vpop.f32.mrb[0].mxu0
    %v1386 = vadd.f32 %v1257, %v1385
    %v1387 = vpop.f32.mrb[0].mxu0
    %1388 = vmatprep.mubr.f32.mxu0 0.0
    %1389 = vmatmul.mubr.f32.gmra.mrb[0].mxu0 %v1299
    %v1390 = vpop.f32.mrb[0].mxu0
    %v1391 = vadd.f32 %v1262, %v1390
    %v1392 = vpop.f32.mrb[0].mxu0
    %1393 = vmatprep.mubr.f32.mxu0 0.0
    %1394 = vmatmul.mubr.f32.gmra.mrb[0].mxu0 %v1302
    %v1395 = vpop.f32.mrb[0].mxu0
    %v1396 = vadd.f32 %v1267, %v1395
    %v1397 = vpop.f32.mrb[0].mxu0
    %1398 = vmatprep.mubr.f32.mxu0 0.0
    %1399 = vmatmul.mubr.f32.gmra.mrb[0].mxu0 %v1305
    %v1400 = vpop.f32.mrb[0].mxu0
    %v1401 = vadd.f32 %v1272, %v1400
    %v1402 = vpop.f32.mrb[0].mxu0
    %1403 = vmatprep.mubr.f32.mxu0 0.0
    %1404 = vmatmul.mubr.f32.gmra.mrb[0].mxu0 %v1308
    %v1405 = vpop.f32.mrb[0].mxu0
    %v1406 = vadd.f32 %v1277, %v1405
    %v1407 = vpop.f32.mrb[0].mxu0
    %1408 = vmatprep.mubr.f32.mxu0 0.0
    %1409 = vmatmul.mubr.f32.gmra.mrb[0].mxu0 %v1311
    %v1410 = vpop.f32.mrb[0].mxu0
    %v1411 = vadd.f32 %v1282, %v1410
    %v1412 = vpop.f32.mrb[0].mxu0
    %1413 = vmatprep.mubr.f32.mxu0 0.0
    %1414 = vmatmul.mubr.f32.gmra.mrb[0].mxu0 %v1314
    %v1415 = vpop.f32.mrb[0].mxu0
    %v1416 = vadd.f32 %v1287, %v1415
    %v1417 = vpop.f32.mrb[0].mxu0
    %1418 = vmatprep.mubr.f32.mxu0 0.0
    %1419 = vmatmul.mubr.f32.gmra.mrb[0].mxu0 %v1317
    %v1420 = vpop.f32.mrb[0].mxu0
    %v1421 = vadd.f32 %v1292, %v1420
    %v1422 = vpop.f32.mrb[0].mxu0
    %1423 = vdwg.mxu0
    %v1424 = vadd.f32 %v1386, %v1200
    %v1425 = vadd.f32 %v1391, %v1205
    %v1426 = vadd.f32 %v1396, %v1210
    %v1427 = vadd.f32 %v1401, %v1215
    %v1428 = vadd.f32 %v1406, %v1220
    %v1429 = vadd.f32 %v1411, %v1225
    %v1430 = vadd.f32 %v1416, %v1230
    %v1431 = vadd.f32 %v1421, %v1235
    %1432 = vst [vmem:[#allocation2] sm:$0xff] %v1424
    %1433 = vst [vmem:[#allocation2 + $0x8] sm:$0xff] %v1425
    %1434 = vst [vmem:[#allocation2 + $0x10] sm:$0xff] %v1426
    %1435 = vst [vmem:[#allocation2 + $0x18] sm:$0xff] %v1427
    %1436 = vst [vmem:[#allocation2 + $0x20] sm:$0xff] %v1428
    %1437 = vst [vmem:[#allocation2 + $0x28] sm:$0xff] %v1429
    %1438 = vst [vmem:[#allocation2 + $0x30] sm:$0xff] %v1430
    %1439 = vst [vmem:[#allocation2 + $0x38] sm:$0xff] %v1431
    %s1440 = scalar_lea.vmem %s0, 32
    %v1441 = vld [vmem:[%s1440] sm:$0xff]
    %v1442 = vld [vmem:[%s1440 + $0x8] sm:$0xff]
    %v1443 = vld [vmem:[%s1440 + $0x10] sm:$0xff]
    %v1444 = vld [vmem:[%s1440 + $0x18] sm:$0xff]
    %v1445 = vld [vmem:[%s2] sm:$0xff]
    %v1446 = vld [vmem:[%s2 + $0x8] sm:$0xff]
    %v1447 = vld [vmem:[%s2 + $0x10] sm:$0xff]
    %v1448 = vld [vmem:[%s2 + $0x18] sm:$0xff]
    %v1449 = vld [vmem:[%s3] sm:$0xff]
    %v1450 = vld [vmem:[%s3 + $0x8] sm:$0xff]
    %v1451 = vld [vmem:[%s3 + $0x10] sm:$0xff]
    %v1452 = vld [vmem:[%s3 + $0x18] sm:$0xff]
    %1453 = vadd.xlane.f32.xlu0 %v1441
    %v1454 = vpop.xlane.xlu0 %1453
    %1455 = vadd.xlane.f32.xlu0 %v1442
    %v1456 = vpop.xlane.xlu0 %1455
    %1457 = vadd.xlane.f32.xlu0 %v1443
    %v1458 = vpop.xlane.xlu0 %1457
    %1459 = vadd.xlane.f32.xlu0 %v1444
    %v1460 = vpop.xlane.xlu0 %1459
    %v1461 = vmul.f32 %v1441, %v1441
    %v1462 = vmul.f32 %v1442, %v1442
    %v1463 = vmul.f32 %v1443, %v1443
    %v1464 = vmul.f32 %v1444, %v1444
    %1465 = vadd.xlane.f32.xlu0 %v1461
    %v1466 = vpop.xlane.xlu0 %1465
    %1467 = vadd.xlane.f32.xlu0 %v1462
    %v1468 = vpop.xlane.xlu0 %1467
    %1469 = vadd.xlane.f32.xlu0 %v1463
    %v1470 = vpop.xlane.xlu0 %1469
    %1471 = vadd.xlane.f32.xlu0 %v1464
    %v1472 = vpop.xlane.xlu0 %1471
    %v1473 = vmul.f32 %v1454, 0.0078125
    %v1474 = vmul.f32 %v1456, 0.0078125
    %v1475 = vmul.f32 %v1458, 0.0078125
    %v1476 = vmul.f32 %v1460, 0.0078125
    %v1477 = vmul.f32 %v1466, 0.0078125
    %v1478 = vmul.f32 %v1468, 0.0078125
    %v1479 = vmul.f32 %v1470, 0.0078125
    %v1480 = vmul.f32 %v1472, 0.0078125
    %v1481 = vmul.f32 %v1473, %v1473
    %v1482 = vmul.f32 %v1474, %v1474
    %v1483 = vmul.f32 %v1475, %v1475
    %v1484 = vmul.f32 %v1476, %v1476
    %v1485 = vsub.f32 %v1477, %v1481
    %v1486 = vsub.f32 %v1478, %v1482
    %v1487 = vsub.f32 %v1479, %v1483
    %v1488 = vsub.f32 %v1480, %v1484
    %v1489 = vmax.f32 %v1485, 0.0
    %v1490 = vmax.f32 %v1486, 0.0
    %v1491 = vmax.f32 %v1487, 0.0
    %v1492 = vmax.f32 %v1488, 0.0
    %v1493 = vsub.f32 %v1441, %v1473
    %v1494 = vsub.f32 %v1442, %v1474
    %v1495 = vsub.f32 %v1443, %v1475
    %v1496 = vsub.f32 %v1444, %v1476
    %v1497 = vadd.f32 %v1489, 1e-06
    %v1498 = vadd.f32 %v1490, 1e-06
    %v1499 = vadd.f32 %v1491, 1e-06
    %v1500 = vadd.f32 %v1492, 1e-06
    %v1501 = vrsqrt.pop %v1497
    %v1502 = vrsqrt.pop %v1498
    %v1503 = vrsqrt.pop %v1499
    %v1504 = vrsqrt.pop %v1500
    %v1505 = vmul.f32 %v1493, %v1501
    %v1506 = vmul.f32 %v1494, %v1502
    %v1507 = vmul.f32 %v1495, %v1503
    %v1508 = vmul.f32 %v1496, %v1504
    %1510 = vset.pattern.permute.xlu0 0
    %1511 = vperm.xlu0 %1510, %v1445
    %v1512 = vpop.permute.xlu0 %1511
    %1515 = vset.pattern.permute.xlu0 0
    %1516 = vperm.xlu0 %1515, %v1446
    %v1517 = vpop.permute.xlu0 %1516
    %1520 = vset.pattern.permute.xlu0 0
    %1521 = vperm.xlu0 %1520, %v1447
    %v1522 = vpop.permute.xlu0 %1521
    %1525 = vset.pattern.permute.xlu0 0
    %1526 = vperm.xlu0 %1525, %v1448
    %v1527 = vpop.permute.xlu0 %1526
    %v1529 = vmul.f32 %v1505, %v1512
    %v1530 = vmul.f32 %v1506, %v1517
    %v1531 = vmul.f32 %v1507, %v1522
    %v1532 = vmul.f32 %v1508, %v1527
    %1534 = vset.pattern.permute.xlu0 0
    %1535 = vperm.xlu0 %1534, %v1449
    %v1536 = vpop.permute.xlu0 %1535
    %1539 = vset.pattern.permute.xlu0 0
    %1540 = vperm.xlu0 %1539, %v1450
    %v1541 = vpop.permute.xlu0 %1540
    %1544 = vset.pattern.permute.xlu0 0
    %1545 = vperm.xlu0 %1544, %v1451
    %v1546 = vpop.permute.xlu0 %1545
    %1549 = vset.pattern.permute.xlu0 0
    %1550 = vperm.xlu0 %1549, %v1452
    %v1551 = vpop.permute.xlu0 %1550
    %v1553 = vadd.f32 %v1529, %v1536
    %v1554 = vadd.f32 %v1530, %v1541
    %v1555 = vadd.f32 %v1531, %v1546
    %v1556 = vadd.f32 %v1532, %v1551
    %v1557 = vxor.u32 %v1553, 2147483648
    %v1558 = vxor.u32 %v1554, 2147483648
    %v1559 = vxor.u32 %v1555, 2147483648
    %v1560 = vxor.u32 %v1556, 2147483648
    %v1561 = vmul.f32 %v1557, 1.442695
    %v1562 = vpow.pop %v1561
    %v1563 = vmul.f32 %v1558, 1.442695
    %v1564 = vpow.pop %v1563
    %v1565 = vmul.f32 %v1559, 1.442695
    %v1566 = vpow.pop %v1565
    %v1567 = vmul.f32 %v1560, 1.442695
    %v1568 = vpow.pop %v1567
    %v1569 = vadd.f32 %v1562, 1.0
    %v1570 = vadd.f32 %v1564, 1.0
    %v1571 = vadd.f32 %v1566, 1.0
    %v1572 = vadd.f32 %v1568, 1.0
    %v1573 = vrcp.pop %v1569
    %v1574 = vmul.f32 1.0, %v1573
    %v1575 = vrcp.pop %v1570
    %v1576 = vmul.f32 1.0, %v1575
    %v1577 = vrcp.pop %v1571
    %v1578 = vmul.f32 1.0, %v1577
    %v1579 = vrcp.pop %v1572
    %v1580 = vmul.f32 1.0, %v1579
    %v1581 = vmul.f32 %v1553, %v1574
    %v1582 = vmul.f32 %v1554, %v1576
    %v1583 = vmul.f32 %v1555, %v1578
    %v1584 = vmul.f32 %v1556, %v1580
    %v1585 = vld [vmem:[%s6] sm:$0xff]
    %v1586 = vld [vmem:[%s6 + $0x8] sm:$0xff]
    %v1587 = vld [vmem:[%s6 + $0x10] sm:$0xff]
    %v1588 = vld [vmem:[%s6 + $0x18] sm:$0xff]
    %v1589 = vld [vmem:[%s6 + $0x20] sm:$0xff]
    %v1590 = vld [vmem:[%s6 + $0x28] sm:$0xff]
    %v1591 = vld [vmem:[%s6 + $0x30] sm:$0xff]
    %v1592 = vld [vmem:[%s6 + $0x38] sm:$0xff]
    %1593 = vrot.lane.b32.xlu0 %v1581, 1
    %v1594 = vpop.permute.xlu0 %1593
    %1595 = vrot.lane.b32.xlu0 %v1582, 1
    %v1596 = vpop.permute.xlu0 %1595
    %1597 = vrot.lane.b32.xlu0 %v1583, 1
    %v1598 = vpop.permute.xlu0 %1597
    %1599 = vrot.lane.b32.xlu0 %v1584, 1
    %v1600 = vpop.permute.xlu0 %1599
    %v1601 = vsel %vm213, 0.0, %v1594
    %v1602 = vsel %vm213, 0.0, %v1596
    %v1603 = vsel %vm213, 0.0, %v1598
    %v1604 = vsel %vm213, 0.0, %v1600
    %1605 = vrot.lane.b32.xlu0 %v1581, 127
    %v1606 = vpop.permute.xlu0 %1605
    %1607 = vrot.lane.b32.xlu0 %v1582, 127
    %v1608 = vpop.permute.xlu0 %1607
    %1609 = vrot.lane.b32.xlu0 %v1583, 127
    %v1610 = vpop.permute.xlu0 %1609
    %1611 = vrot.lane.b32.xlu0 %v1584, 127
    %v1612 = vpop.permute.xlu0 %1611
    %v1613 = vsel %vm227, 0.0, %v1606
    %v1614 = vsel %vm227, 0.0, %v1608
    %v1615 = vsel %vm227, 0.0, %v1610
    %v1616 = vsel %vm227, 0.0, %v1612
    %v1617 = vld [vmem:[%s5] sm:$0xff]
    %v1618 = vld [vmem:[%s5 + $0x8] sm:$0xff]
    %v1619 = vld [vmem:[%s5 + $0x10] sm:$0xff]
    %v1620 = vld [vmem:[%s5 + $0x18] sm:$0xff]
    %v1621 = vld [vmem:[%s5 + $0x20] sm:$0xff]
    %v1622 = vld [vmem:[%s5 + $0x28] sm:$0xff]
    %v1623 = vld [vmem:[%s5 + $0x30] sm:$0xff]
    %v1624 = vld [vmem:[%s5 + $0x38] sm:$0xff]
    %1626 = vset.pattern.permute.xlu0 0
    %1627 = vperm.xlu0 %1626, %v1585
    %v1628 = vpop.permute.xlu0 %1627
    %1631 = vset.pattern.permute.xlu0 0
    %1632 = vperm.xlu0 %1631, %v1586
    %v1633 = vpop.permute.xlu0 %1632
    %1636 = vset.pattern.permute.xlu0 0
    %1637 = vperm.xlu0 %1636, %v1587
    %v1638 = vpop.permute.xlu0 %1637
    %1641 = vset.pattern.permute.xlu0 0
    %1642 = vperm.xlu0 %1641, %v1588
    %v1643 = vpop.permute.xlu0 %1642
    %1646 = vset.pattern.permute.xlu0 0
    %1647 = vperm.xlu0 %1646, %v1589
    %v1648 = vpop.permute.xlu0 %1647
    %1651 = vset.pattern.permute.xlu0 0
    %1652 = vperm.xlu0 %1651, %v1590
    %v1653 = vpop.permute.xlu0 %1652
    %1656 = vset.pattern.permute.xlu0 0
    %1657 = vperm.xlu0 %1656, %v1591
    %v1658 = vpop.permute.xlu0 %1657
    %1661 = vset.pattern.permute.xlu0 0
    %1662 = vperm.xlu0 %1661, %v1592
    %v1663 = vpop.permute.xlu0 %1662
    %v1666 = vsel %vm280, %v1617, 0
    %v1669 = vsel %vm280, %v1618, 0
    %v1672 = vsel %vm280, %v1619, 0
    %v1675 = vsel %vm280, %v1620, 0
    %v1678 = vsel %vm280, %v1621, 0
    %v1681 = vsel %vm280, %v1622, 0
    %v1684 = vsel %vm280, %v1623, 0
    %v1687 = vsel %vm280, %v1624, 0
    %1689 = vmatprep.subr.mxu0 0.0
    %1690 = vmatpush1.msra.mxu0 %v1601
    %1691 = vmatprep.subr.mxu0 0.0
    %1692 = vmatpush1.msra.mxu0 %v1602
    %1693 = vmatprep.subr.mxu0 0.0
    %1694 = vmatpush1.msra.mxu0 %v1603
    %1695 = vmatprep.subr.mxu0 0.0
    %1696 = vmatpush1.msra.mxu0 %v1604
    %1697 = vmatprep.subr.mxu0 0.0
    %1698 = vmatpush1.msra.mxu0 %v1581
    %1699 = vmatprep.subr.mxu0 0.0
    %1700 = vmatpush1.msra.mxu0 %v1582
    %1701 = vmatprep.subr.mxu0 0.0
    %1702 = vmatpush1.msra.mxu0 %v1583
    %1703 = vmatprep.subr.mxu0 0.0
    %1704 = vmatpush1.msra.mxu0 %v1584
    %1705 = vmatprep.subr.mxu0 0.0
    %1706 = vmatpush1.msra.mxu0 %v1613
    %1707 = vmatprep.subr.mxu0 0.0
    %1708 = vmatpush1.msra.mxu0 %v1614
    %1709 = vmatprep.subr.mxu0 0.0
    %1710 = vmatpush1.msra.mxu0 %v1615
    %1711 = vmatprep.subr.mxu0 0.0
    %1712 = vmatpush1.msra.mxu0 %v1616
    %1713 = vmatprep.subr.mxu0 0.0
    %1714 = vmatpush1.msra.mxu0 0.0
    %1715 = vmatprep.subr.mxu0 0.0
    %1716 = vmatpush1.msra.mxu0 0.0
    %1717 = vmatprep.subr.mxu0 0.0
    %1718 = vmatpush1.msra.mxu0 0.0
    %1719 = vmatprep.subr.mxu0 0.0
    %1720 = vmatpush1.msra.mxu0 0.0
    %1721 = vmatprep.subr.mxu0 0.0
    %1722 = vmatpush1.msra.mxu0 0.0
    %1723 = vmatprep.subr.mxu0 0.0
    %1724 = vmatpush1.msra.mxu0 0.0
    %1725 = vmatprep.subr.mxu0 0.0
    %1726 = vmatpush1.msra.mxu0 0.0
    %1727 = vmatprep.subr.mxu0 0.0
    %1728 = vmatpush1.msra.mxu0 0.0
    %1729 = vmatprep.subr.mxu0 0.0
    %1730 = vmatpush1.msra.mxu0 0.0
    %1731 = vmatprep.subr.mxu0 0.0
    %1732 = vmatpush1.msra.mxu0 0.0
    %1733 = vmatprep.subr.mxu0 0.0
    %1734 = vmatpush1.msra.mxu0 0.0
    %1735 = vmatprep.subr.mxu0 0.0
    %1736 = vmatpush1.msra.mxu0 0.0
    %1737 = vmatprep.subr.mxu0 0.0
    %1738 = vmatpush1.msra.mxu0 0.0
    %1739 = vmatprep.subr.mxu0 0.0
    %1740 = vmatpush1.msra.mxu0 0.0
    %1741 = vmatprep.subr.mxu0 0.0
    %1742 = vmatpush1.msra.mxu0 0.0
    %1743 = vmatprep.subr.mxu0 0.0
    %1744 = vmatpush1.msra.mxu0 0.0
    %1745 = vmatprep.subr.mxu0 0.0
    %1746 = vmatpush1.msra.mxu0 0.0
    %1747 = vmatprep.subr.mxu0 0.0
    %1748 = vmatpush1.msra.mxu0 0.0
    %1749 = vmatprep.subr.mxu0 0.0
    %1750 = vmatpush1.msra.mxu0 0.0
    %1751 = vmatprep.subr.mxu0 0.0
    %1752 = vmatpush1.msra.mxu0 0.0
    %1753 = vmatprep.mubr.f32.mxu0 0.0
    %1754 = vmatmul.mubr.f32.gmra.mrb[0].mxu0 %v1666
    %v1755 = vpop.f32.mrb[0].mxu0
    %v1756 = vadd.f32 %v1628, %v1755
    %v1757 = vpop.f32.mrb[0].mxu0
    %1758 = vmatprep.mubr.f32.mxu0 0.0
    %1759 = vmatmul.mubr.f32.gmra.mrb[0].mxu0 %v1669
    %v1760 = vpop.f32.mrb[0].mxu0
    %v1761 = vadd.f32 %v1633, %v1760
    %v1762 = vpop.f32.mrb[0].mxu0
    %1763 = vmatprep.mubr.f32.mxu0 0.0
    %1764 = vmatmul.mubr.f32.gmra.mrb[0].mxu0 %v1672
    %v1765 = vpop.f32.mrb[0].mxu0
    %v1766 = vadd.f32 %v1638, %v1765
    %v1767 = vpop.f32.mrb[0].mxu0
    %1768 = vmatprep.mubr.f32.mxu0 0.0
    %1769 = vmatmul.mubr.f32.gmra.mrb[0].mxu0 %v1675
    %v1770 = vpop.f32.mrb[0].mxu0
    %v1771 = vadd.f32 %v1643, %v1770
    %v1772 = vpop.f32.mrb[0].mxu0
    %1773 = vmatprep.mubr.f32.mxu0 0.0
    %1774 = vmatmul.mubr.f32.gmra.mrb[0].mxu0 %v1678
    %v1775 = vpop.f32.mrb[0].mxu0
    %v1776 = vadd.f32 %v1648, %v1775
    %v1777 = vpop.f32.mrb[0].mxu0
    %1778 = vmatprep.mubr.f32.mxu0 0.0
    %1779 = vmatmul.mubr.f32.gmra.mrb[0].mxu0 %v1681
    %v1780 = vpop.f32.mrb[0].mxu0
    %v1781 = vadd.f32 %v1653, %v1780
    %v1782 = vpop.f32.mrb[0].mxu0
    %1783 = vmatprep.mubr.f32.mxu0 0.0
    %1784 = vmatmul.mubr.f32.gmra.mrb[0].mxu0 %v1684
    %v1785 = vpop.f32.mrb[0].mxu0
    %v1786 = vadd.f32 %v1658, %v1785
    %v1787 = vpop.f32.mrb[0].mxu0
    %1788 = vmatprep.mubr.f32.mxu0 0.0
    %1789 = vmatmul.mubr.f32.gmra.mrb[0].mxu0 %v1687
    %v1790 = vpop.f32.mrb[0].mxu0
    %v1791 = vadd.f32 %v1663, %v1790
    %v1792 = vpop.f32.mrb[0].mxu0
    %1793 = vdwg.mxu0
    %s1794 = scalar_lea.vmem %s1, 64
    %v1795 = vld [vmem:[%s1794] sm:$0xff]
    %v1796 = vld [vmem:[%s1794 + $0x8] sm:$0xff]
    %v1797 = vld [vmem:[%s1794 + $0x10] sm:$0xff]
    %v1798 = vld [vmem:[%s1794 + $0x18] sm:$0xff]
    %v1799 = vld [vmem:[%s1794 + $0x20] sm:$0xff]
    %v1800 = vld [vmem:[%s1794 + $0x28] sm:$0xff]
    %v1801 = vld [vmem:[%s1794 + $0x30] sm:$0xff]
    %v1802 = vld [vmem:[%s1794 + $0x38] sm:$0xff]
    %1804 = vset.pattern.permute.xlu0 0
    %1805 = vperm.xlu0 %1804, %v1795
    %v1806 = vpop.permute.xlu0 %1805
    %1809 = vset.pattern.permute.xlu0 0
    %1810 = vperm.xlu0 %1809, %v1796
    %v1811 = vpop.permute.xlu0 %1810
    %1814 = vset.pattern.permute.xlu0 0
    %1815 = vperm.xlu0 %1814, %v1797
    %v1816 = vpop.permute.xlu0 %1815
    %1819 = vset.pattern.permute.xlu0 0
    %1820 = vperm.xlu0 %1819, %v1798
    %v1821 = vpop.permute.xlu0 %1820
    %1824 = vset.pattern.permute.xlu0 0
    %1825 = vperm.xlu0 %1824, %v1799
    %v1826 = vpop.permute.xlu0 %1825
    %1829 = vset.pattern.permute.xlu0 0
    %1830 = vperm.xlu0 %1829, %v1800
    %v1831 = vpop.permute.xlu0 %1830
    %1834 = vset.pattern.permute.xlu0 0
    %1835 = vperm.xlu0 %1834, %v1801
    %v1836 = vpop.permute.xlu0 %1835
    %1839 = vset.pattern.permute.xlu0 0
    %1840 = vperm.xlu0 %1839, %v1802
    %v1841 = vpop.permute.xlu0 %1840
    %v1843 = vadd.f32 %v1756, %v1806
    %v1844 = vadd.f32 %v1761, %v1811
    %v1845 = vadd.f32 %v1766, %v1816
    %v1846 = vadd.f32 %v1771, %v1821
    %v1847 = vadd.f32 %v1776, %v1826
    %v1848 = vadd.f32 %v1781, %v1831
    %v1849 = vadd.f32 %v1786, %v1836
    %v1850 = vadd.f32 %v1791, %v1841
    %v1851 = vld [vmem:[%s7] sm:$0xff]
    %v1852 = vld [vmem:[%s7 + $0x8] sm:$0xff]
    %v1853 = vld [vmem:[%s7 + $0x10] sm:$0xff]
    %v1854 = vld [vmem:[%s7 + $0x18] sm:$0xff]
    %v1855 = vld [vmem:[%s7 + $0x20] sm:$0xff]
    %v1856 = vld [vmem:[%s7 + $0x28] sm:$0xff]
    %v1857 = vld [vmem:[%s7 + $0x30] sm:$0xff]
    %v1858 = vld [vmem:[%s7 + $0x38] sm:$0xff]
    %v1859 = vld [vmem:[%s8] sm:$0xff]
    %v1860 = vld [vmem:[%s8 + $0x8] sm:$0xff]
    %v1861 = vld [vmem:[%s8 + $0x10] sm:$0xff]
    %v1862 = vld [vmem:[%s8 + $0x18] sm:$0xff]
    %v1863 = vld [vmem:[%s8 + $0x20] sm:$0xff]
    %v1864 = vld [vmem:[%s8 + $0x28] sm:$0xff]
    %v1865 = vld [vmem:[%s8 + $0x30] sm:$0xff]
    %v1866 = vld [vmem:[%s8 + $0x38] sm:$0xff]
    %1867 = vadd.xlane.f32.xlu0 %v1843
    %v1868 = vpop.xlane.xlu0 %1867
    %1869 = vadd.xlane.f32.xlu0 %v1844
    %v1870 = vpop.xlane.xlu0 %1869
    %1871 = vadd.xlane.f32.xlu0 %v1845
    %v1872 = vpop.xlane.xlu0 %1871
    %1873 = vadd.xlane.f32.xlu0 %v1846
    %v1874 = vpop.xlane.xlu0 %1873
    %1875 = vadd.xlane.f32.xlu0 %v1847
    %v1876 = vpop.xlane.xlu0 %1875
    %1877 = vadd.xlane.f32.xlu0 %v1848
    %v1878 = vpop.xlane.xlu0 %1877
    %1879 = vadd.xlane.f32.xlu0 %v1849
    %v1880 = vpop.xlane.xlu0 %1879
    %1881 = vadd.xlane.f32.xlu0 %v1850
    %v1882 = vpop.xlane.xlu0 %1881
    %v1883 = vmul.f32 %v1843, %v1843
    %v1884 = vmul.f32 %v1844, %v1844
    %v1885 = vmul.f32 %v1845, %v1845
    %v1886 = vmul.f32 %v1846, %v1846
    %v1887 = vmul.f32 %v1847, %v1847
    %v1888 = vmul.f32 %v1848, %v1848
    %v1889 = vmul.f32 %v1849, %v1849
    %v1890 = vmul.f32 %v1850, %v1850
    %1891 = vadd.xlane.f32.xlu0 %v1883
    %v1892 = vpop.xlane.xlu0 %1891
    %1893 = vadd.xlane.f32.xlu0 %v1884
    %v1894 = vpop.xlane.xlu0 %1893
    %1895 = vadd.xlane.f32.xlu0 %v1885
    %v1896 = vpop.xlane.xlu0 %1895
    %1897 = vadd.xlane.f32.xlu0 %v1886
    %v1898 = vpop.xlane.xlu0 %1897
    %1899 = vadd.xlane.f32.xlu0 %v1887
    %v1900 = vpop.xlane.xlu0 %1899
    %1901 = vadd.xlane.f32.xlu0 %v1888
    %v1902 = vpop.xlane.xlu0 %1901
    %1903 = vadd.xlane.f32.xlu0 %v1889
    %v1904 = vpop.xlane.xlu0 %1903
    %1905 = vadd.xlane.f32.xlu0 %v1890
    %v1906 = vpop.xlane.xlu0 %1905
    %v1907 = vsel %vm522, %v1868, %v1892
    %v1908 = vsel %vm522, %v1870, %v1894
    %v1909 = vsel %vm522, %v1872, %v1896
    %v1910 = vsel %vm522, %v1874, %v1898
    %v1911 = vsel %vm522, %v1876, %v1900
    %v1912 = vsel %vm522, %v1878, %v1902
    %v1913 = vsel %vm522, %v1880, %v1904
    %v1914 = vsel %vm522, %v1882, %v1906
    %v1915 = vld [vmem:[%s9] sm:$0xff]
    %v1916 = vld [vmem:[%s9 + $0x8] sm:$0xff]
    %v1917 = vld [vmem:[%s9 + $0x10] sm:$0xff]
    %v1918 = vld [vmem:[%s9 + $0x18] sm:$0xff]
    %v1919 = vld [vmem:[%s9 + $0x20] sm:$0xff]
    %v1920 = vld [vmem:[%s9 + $0x28] sm:$0xff]
    %v1921 = vld [vmem:[%s9 + $0x30] sm:$0xff]
    %v1922 = vld [vmem:[%s9 + $0x38] sm:$0xff]
    %v1924 = vsel %vm539, %v1915, 0
    %v1927 = vsel %vm539, %v1916, 0
    %v1930 = vsel %vm539, %v1917, 0
    %v1933 = vsel %vm539, %v1918, 0
    %v1936 = vsel %vm539, %v1919, 0
    %v1939 = vsel %vm539, %v1920, 0
    %v1942 = vsel %vm539, %v1921, 0
    %v1945 = vsel %vm539, %v1922, 0
    %1947 = vmatprep.subr.mxu0 0.0
    %1948 = vmatpush1.msra.mxu0 %v1907
    %1949 = vmatprep.subr.mxu0 0.0
    %1950 = vmatpush1.msra.mxu0 %v1908
    %1951 = vmatprep.subr.mxu0 0.0
    %1952 = vmatpush1.msra.mxu0 %v1909
    %1953 = vmatprep.subr.mxu0 0.0
    %1954 = vmatpush1.msra.mxu0 %v1910
    %1955 = vmatprep.subr.mxu0 0.0
    %1956 = vmatpush1.msra.mxu0 %v1911
    %1957 = vmatprep.subr.mxu0 0.0
    %1958 = vmatpush1.msra.mxu0 %v1912
    %1959 = vmatprep.subr.mxu0 0.0
    %1960 = vmatpush1.msra.mxu0 %v1913
    %1961 = vmatprep.subr.mxu0 0.0
    %1962 = vmatpush1.msra.mxu0 %v1914
    %1963 = vmatprep.subr.mxu0 0.0
    %1964 = vmatpush1.msra.mxu0 0.0
    %1965 = vmatprep.subr.mxu0 0.0
    %1966 = vmatpush1.msra.mxu0 0.0
    %1967 = vmatprep.subr.mxu0 0.0
    %1968 = vmatpush1.msra.mxu0 0.0
    %1969 = vmatprep.subr.mxu0 0.0
    %1970 = vmatpush1.msra.mxu0 0.0
    %1971 = vmatprep.subr.mxu0 0.0
    %1972 = vmatpush1.msra.mxu0 0.0
    %1973 = vmatprep.subr.mxu0 0.0
    %1974 = vmatpush1.msra.mxu0 0.0
    %1975 = vmatprep.subr.mxu0 0.0
    %1976 = vmatpush1.msra.mxu0 0.0
    %1977 = vmatprep.subr.mxu0 0.0
    %1978 = vmatpush1.msra.mxu0 0.0
    %1979 = vmatprep.subr.mxu0 0.0
    %1980 = vmatpush1.msra.mxu0 0.0
    %1981 = vmatprep.subr.mxu0 0.0
    %1982 = vmatpush1.msra.mxu0 0.0
    %1983 = vmatprep.subr.mxu0 0.0
    %1984 = vmatpush1.msra.mxu0 0.0
    %1985 = vmatprep.subr.mxu0 0.0
    %1986 = vmatpush1.msra.mxu0 0.0
    %1987 = vmatprep.subr.mxu0 0.0
    %1988 = vmatpush1.msra.mxu0 0.0
    %1989 = vmatprep.subr.mxu0 0.0
    %1990 = vmatpush1.msra.mxu0 0.0
    %1991 = vmatprep.subr.mxu0 0.0
    %1992 = vmatpush1.msra.mxu0 0.0
    %1993 = vmatprep.subr.mxu0 0.0
    %1994 = vmatpush1.msra.mxu0 0.0
    %1995 = vmatprep.subr.mxu0 0.0
    %1996 = vmatpush1.msra.mxu0 0.0
    %1997 = vmatprep.subr.mxu0 0.0
    %1998 = vmatpush1.msra.mxu0 0.0
    %1999 = vmatprep.subr.mxu0 0.0
    %2000 = vmatpush1.msra.mxu0 0.0
    %2001 = vmatprep.subr.mxu0 0.0
    %2002 = vmatpush1.msra.mxu0 0.0
    %2003 = vmatprep.subr.mxu0 0.0
    %2004 = vmatpush1.msra.mxu0 0.0
    %2005 = vmatprep.subr.mxu0 0.0
    %2006 = vmatpush1.msra.mxu0 0.0
    %2007 = vmatprep.subr.mxu0 0.0
    %2008 = vmatpush1.msra.mxu0 0.0
    %2009 = vmatprep.subr.mxu0 0.0
    %2010 = vmatpush1.msra.mxu0 0.0
    %2011 = vmatprep.mubr.f32.mxu0 0.0
    %2012 = vmatmul.mubr.f32.gmra.mrb[0].mxu0 %v1924
    %v2013 = vpop.f32.mrb[0].mxu0
    %v2014 = vadd.f32 0.0, %v2013
    %v2015 = vpop.f32.mrb[0].mxu0
    %2016 = vmatprep.mubr.f32.mxu0 0.0
    %2017 = vmatmul.mubr.f32.gmra.mrb[0].mxu0 %v1927
    %v2018 = vpop.f32.mrb[0].mxu0
    %v2019 = vadd.f32 0.0, %v2018
    %v2020 = vpop.f32.mrb[0].mxu0
    %2021 = vmatprep.mubr.f32.mxu0 0.0
    %2022 = vmatmul.mubr.f32.gmra.mrb[0].mxu0 %v1930
    %v2023 = vpop.f32.mrb[0].mxu0
    %v2024 = vadd.f32 0.0, %v2023
    %v2025 = vpop.f32.mrb[0].mxu0
    %2026 = vmatprep.mubr.f32.mxu0 0.0
    %2027 = vmatmul.mubr.f32.gmra.mrb[0].mxu0 %v1933
    %v2028 = vpop.f32.mrb[0].mxu0
    %v2029 = vadd.f32 0.0, %v2028
    %v2030 = vpop.f32.mrb[0].mxu0
    %2031 = vmatprep.mubr.f32.mxu0 0.0
    %2032 = vmatmul.mubr.f32.gmra.mrb[0].mxu0 %v1936
    %v2033 = vpop.f32.mrb[0].mxu0
    %v2034 = vadd.f32 0.0, %v2033
    %v2035 = vpop.f32.mrb[0].mxu0
    %2036 = vmatprep.mubr.f32.mxu0 0.0
    %2037 = vmatmul.mubr.f32.gmra.mrb[0].mxu0 %v1939
    %v2038 = vpop.f32.mrb[0].mxu0
    %v2039 = vadd.f32 0.0, %v2038
    %v2040 = vpop.f32.mrb[0].mxu0
    %2041 = vmatprep.mubr.f32.mxu0 0.0
    %2042 = vmatmul.mubr.f32.gmra.mrb[0].mxu0 %v1942
    %v2043 = vpop.f32.mrb[0].mxu0
    %v2044 = vadd.f32 0.0, %v2043
    %v2045 = vpop.f32.mrb[0].mxu0
    %2046 = vmatprep.mubr.f32.mxu0 0.0
    %2047 = vmatmul.mubr.f32.gmra.mrb[0].mxu0 %v1945
    %v2048 = vpop.f32.mrb[0].mxu0
    %v2049 = vadd.f32 0.0, %v2048
    %v2050 = vpop.f32.mrb[0].mxu0
    %2051 = vdwg.mxu0
    %v2052 = vmul.f32 %v2014, 0.00390625
    %v2053 = vmul.f32 %v2019, 0.00390625
    %v2054 = vmul.f32 %v2024, 0.00390625
    %v2055 = vmul.f32 %v2029, 0.00390625
    %v2056 = vmul.f32 %v2034, 0.00390625
    %v2057 = vmul.f32 %v2039, 0.00390625
    %v2058 = vmul.f32 %v2044, 0.00390625
    %v2059 = vmul.f32 %v2049, 0.00390625
    %v2060 = vmul.f32 %v2052, %v2052
    %v2061 = vmul.f32 %v2053, %v2053
    %v2062 = vmul.f32 %v2054, %v2054
    %v2063 = vmul.f32 %v2055, %v2055
    %v2064 = vmul.f32 %v2056, %v2056
    %v2065 = vmul.f32 %v2057, %v2057
    %v2066 = vmul.f32 %v2058, %v2058
    %v2067 = vmul.f32 %v2059, %v2059
    %2076 = vrot.lane.b32.xlu0 %v2060, 1
    %v2077 = vpop.permute.xlu0 %2076
    %2078 = vrot.lane.b32.xlu0 %v2061, 1
    %v2079 = vpop.permute.xlu0 %2078
    %2080 = vrot.lane.b32.xlu0 %v2062, 1
    %v2081 = vpop.permute.xlu0 %2080
    %2082 = vrot.lane.b32.xlu0 %v2063, 1
    %v2083 = vpop.permute.xlu0 %2082
    %2084 = vrot.lane.b32.xlu0 %v2064, 1
    %v2085 = vpop.permute.xlu0 %2084
    %2086 = vrot.lane.b32.xlu0 %v2065, 1
    %v2087 = vpop.permute.xlu0 %2086
    %2088 = vrot.lane.b32.xlu0 %v2066, 1
    %v2089 = vpop.permute.xlu0 %2088
    %2090 = vrot.lane.b32.xlu0 %v2067, 1
    %v2091 = vpop.permute.xlu0 %2090
    %v2100 = vsub.f32 %v2052, %v2077
    %v2101 = vsub.f32 %v2053, %v2079
    %v2102 = vsub.f32 %v2054, %v2081
    %v2103 = vsub.f32 %v2055, %v2083
    %v2104 = vsub.f32 %v2056, %v2085
    %v2105 = vsub.f32 %v2057, %v2087
    %v2106 = vsub.f32 %v2058, %v2089
    %v2107 = vsub.f32 %v2059, %v2091
    %v2108 = vmax.f32 %v2100, 0.0
    %v2109 = vmax.f32 %v2101, 0.0
    %v2110 = vmax.f32 %v2102, 0.0
    %v2111 = vmax.f32 %v2103, 0.0
    %v2112 = vmax.f32 %v2104, 0.0
    %v2113 = vmax.f32 %v2105, 0.0
    %v2114 = vmax.f32 %v2106, 0.0
    %v2115 = vmax.f32 %v2107, 0.0
    %2117 = vset.pattern.permute.xlu0 0
    %2118 = vperm.xlu0 %2117, %v2052
    %v2119 = vpop.permute.xlu0 %2118
    %2122 = vset.pattern.permute.xlu0 0
    %2123 = vperm.xlu0 %2122, %v2053
    %v2124 = vpop.permute.xlu0 %2123
    %2127 = vset.pattern.permute.xlu0 0
    %2128 = vperm.xlu0 %2127, %v2054
    %v2129 = vpop.permute.xlu0 %2128
    %2132 = vset.pattern.permute.xlu0 0
    %2133 = vperm.xlu0 %2132, %v2055
    %v2134 = vpop.permute.xlu0 %2133
    %2137 = vset.pattern.permute.xlu0 0
    %2138 = vperm.xlu0 %2137, %v2056
    %v2139 = vpop.permute.xlu0 %2138
    %2142 = vset.pattern.permute.xlu0 0
    %2143 = vperm.xlu0 %2142, %v2057
    %v2144 = vpop.permute.xlu0 %2143
    %2147 = vset.pattern.permute.xlu0 0
    %2148 = vperm.xlu0 %2147, %v2058
    %v2149 = vpop.permute.xlu0 %2148
    %2152 = vset.pattern.permute.xlu0 0
    %2153 = vperm.xlu0 %2152, %v2059
    %v2154 = vpop.permute.xlu0 %2153
    %v2156 = vsub.f32 %v1843, %v2119
    %v2157 = vsub.f32 %v1844, %v2124
    %v2158 = vsub.f32 %v1845, %v2129
    %v2159 = vsub.f32 %v1846, %v2134
    %v2160 = vsub.f32 %v1847, %v2139
    %v2161 = vsub.f32 %v1848, %v2144
    %v2162 = vsub.f32 %v1849, %v2149
    %v2163 = vsub.f32 %v1850, %v2154
    %v2164 = vadd.f32 %v2108, 1e-06
    %v2165 = vadd.f32 %v2109, 1e-06
    %v2166 = vadd.f32 %v2110, 1e-06
    %v2167 = vadd.f32 %v2111, 1e-06
    %v2168 = vadd.f32 %v2112, 1e-06
    %v2169 = vadd.f32 %v2113, 1e-06
    %v2170 = vadd.f32 %v2114, 1e-06
    %v2171 = vadd.f32 %v2115, 1e-06
    %v2172 = vrsqrt.pop %v2164
    %v2173 = vrsqrt.pop %v2165
    %v2174 = vrsqrt.pop %v2166
    %v2175 = vrsqrt.pop %v2167
    %v2176 = vrsqrt.pop %v2168
    %v2177 = vrsqrt.pop %v2169
    %v2178 = vrsqrt.pop %v2170
    %v2179 = vrsqrt.pop %v2171
    %2181 = vset.pattern.permute.xlu0 1
    %2182 = vperm.xlu0 %2181, %v2172
    %v2183 = vpop.permute.xlu0 %2182
    %2186 = vset.pattern.permute.xlu0 1
    %2187 = vperm.xlu0 %2186, %v2173
    %v2188 = vpop.permute.xlu0 %2187
    %2191 = vset.pattern.permute.xlu0 1
    %2192 = vperm.xlu0 %2191, %v2174
    %v2193 = vpop.permute.xlu0 %2192
    %2196 = vset.pattern.permute.xlu0 1
    %2197 = vperm.xlu0 %2196, %v2175
    %v2198 = vpop.permute.xlu0 %2197
    %2201 = vset.pattern.permute.xlu0 1
    %2202 = vperm.xlu0 %2201, %v2176
    %v2203 = vpop.permute.xlu0 %2202
    %2206 = vset.pattern.permute.xlu0 1
    %2207 = vperm.xlu0 %2206, %v2177
    %v2208 = vpop.permute.xlu0 %2207
    %2211 = vset.pattern.permute.xlu0 1
    %2212 = vperm.xlu0 %2211, %v2178
    %v2213 = vpop.permute.xlu0 %2212
    %2216 = vset.pattern.permute.xlu0 1
    %2217 = vperm.xlu0 %2216, %v2179
    %v2218 = vpop.permute.xlu0 %2217
    %v2220 = vmul.f32 %v2156, %v2183
    %v2221 = vmul.f32 %v2157, %v2188
    %v2222 = vmul.f32 %v2158, %v2193
    %v2223 = vmul.f32 %v2159, %v2198
    %v2224 = vmul.f32 %v2160, %v2203
    %v2225 = vmul.f32 %v2161, %v2208
    %v2226 = vmul.f32 %v2162, %v2213
    %v2227 = vmul.f32 %v2163, %v2218
    %2229 = vset.pattern.permute.xlu0 0
    %2230 = vperm.xlu0 %2229, %v1851
    %v2231 = vpop.permute.xlu0 %2230
    %2234 = vset.pattern.permute.xlu0 0
    %2235 = vperm.xlu0 %2234, %v1852
    %v2236 = vpop.permute.xlu0 %2235
    %2239 = vset.pattern.permute.xlu0 0
    %2240 = vperm.xlu0 %2239, %v1853
    %v2241 = vpop.permute.xlu0 %2240
    %2244 = vset.pattern.permute.xlu0 0
    %2245 = vperm.xlu0 %2244, %v1854
    %v2246 = vpop.permute.xlu0 %2245
    %2249 = vset.pattern.permute.xlu0 0
    %2250 = vperm.xlu0 %2249, %v1855
    %v2251 = vpop.permute.xlu0 %2250
    %2254 = vset.pattern.permute.xlu0 0
    %2255 = vperm.xlu0 %2254, %v1856
    %v2256 = vpop.permute.xlu0 %2255
    %2259 = vset.pattern.permute.xlu0 0
    %2260 = vperm.xlu0 %2259, %v1857
    %v2261 = vpop.permute.xlu0 %2260
    %2264 = vset.pattern.permute.xlu0 0
    %2265 = vperm.xlu0 %2264, %v1858
    %v2266 = vpop.permute.xlu0 %2265
    %v2268 = vmul.f32 %v2220, %v2231
    %v2269 = vmul.f32 %v2221, %v2236
    %v2270 = vmul.f32 %v2222, %v2241
    %v2271 = vmul.f32 %v2223, %v2246
    %v2272 = vmul.f32 %v2224, %v2251
    %v2273 = vmul.f32 %v2225, %v2256
    %v2274 = vmul.f32 %v2226, %v2261
    %v2275 = vmul.f32 %v2227, %v2266
    %2277 = vset.pattern.permute.xlu0 0
    %2278 = vperm.xlu0 %2277, %v1859
    %v2279 = vpop.permute.xlu0 %2278
    %2282 = vset.pattern.permute.xlu0 0
    %2283 = vperm.xlu0 %2282, %v1860
    %v2284 = vpop.permute.xlu0 %2283
    %2287 = vset.pattern.permute.xlu0 0
    %2288 = vperm.xlu0 %2287, %v1861
    %v2289 = vpop.permute.xlu0 %2288
    %2292 = vset.pattern.permute.xlu0 0
    %2293 = vperm.xlu0 %2292, %v1862
    %v2294 = vpop.permute.xlu0 %2293
    %2297 = vset.pattern.permute.xlu0 0
    %2298 = vperm.xlu0 %2297, %v1863
    %v2299 = vpop.permute.xlu0 %2298
    %2302 = vset.pattern.permute.xlu0 0
    %2303 = vperm.xlu0 %2302, %v1864
    %v2304 = vpop.permute.xlu0 %2303
    %2307 = vset.pattern.permute.xlu0 0
    %2308 = vperm.xlu0 %2307, %v1865
    %v2309 = vpop.permute.xlu0 %2308
    %2312 = vset.pattern.permute.xlu0 0
    %2313 = vperm.xlu0 %2312, %v1866
    %v2314 = vpop.permute.xlu0 %2313
    %v2316 = vadd.f32 %v2268, %v2279
    %v2317 = vadd.f32 %v2269, %v2284
    %v2318 = vadd.f32 %v2270, %v2289
    %v2319 = vadd.f32 %v2271, %v2294
    %v2320 = vadd.f32 %v2272, %v2299
    %v2321 = vadd.f32 %v2273, %v2304
    %v2322 = vadd.f32 %v2274, %v2309
    %v2323 = vadd.f32 %v2275, %v2314
    %v2324 = vxor.u32 %v2316, 2147483648
    %v2325 = vxor.u32 %v2317, 2147483648
    %v2326 = vxor.u32 %v2318, 2147483648
    %v2327 = vxor.u32 %v2319, 2147483648
    %v2328 = vxor.u32 %v2320, 2147483648
    %v2329 = vxor.u32 %v2321, 2147483648
    %v2330 = vxor.u32 %v2322, 2147483648
    %v2331 = vxor.u32 %v2323, 2147483648
    %v2332 = vmul.f32 %v2324, 1.442695
    %v2333 = vpow.pop %v2332
    %v2334 = vmul.f32 %v2325, 1.442695
    %v2335 = vpow.pop %v2334
    %v2336 = vmul.f32 %v2326, 1.442695
    %v2337 = vpow.pop %v2336
    %v2338 = vmul.f32 %v2327, 1.442695
    %v2339 = vpow.pop %v2338
    %v2340 = vmul.f32 %v2328, 1.442695
    %v2341 = vpow.pop %v2340
    %v2342 = vmul.f32 %v2329, 1.442695
    %v2343 = vpow.pop %v2342
    %v2344 = vmul.f32 %v2330, 1.442695
    %v2345 = vpow.pop %v2344
    %v2346 = vmul.f32 %v2331, 1.442695
    %v2347 = vpow.pop %v2346
    %v2348 = vadd.f32 %v2333, 1.0
    %v2349 = vadd.f32 %v2335, 1.0
    %v2350 = vadd.f32 %v2337, 1.0
    %v2351 = vadd.f32 %v2339, 1.0
    %v2352 = vadd.f32 %v2341, 1.0
    %v2353 = vadd.f32 %v2343, 1.0
    %v2354 = vadd.f32 %v2345, 1.0
    %v2355 = vadd.f32 %v2347, 1.0
    %v2356 = vrcp.pop %v2348
    %v2357 = vmul.f32 1.0, %v2356
    %v2358 = vrcp.pop %v2349
    %v2359 = vmul.f32 1.0, %v2358
    %v2360 = vrcp.pop %v2350
    %v2361 = vmul.f32 1.0, %v2360
    %v2362 = vrcp.pop %v2351
    %v2363 = vmul.f32 1.0, %v2362
    %v2364 = vrcp.pop %v2352
    %v2365 = vmul.f32 1.0, %v2364
    %v2366 = vrcp.pop %v2353
    %v2367 = vmul.f32 1.0, %v2366
    %v2368 = vrcp.pop %v2354
    %v2369 = vmul.f32 1.0, %v2368
    %v2370 = vrcp.pop %v2355
    %v2371 = vmul.f32 1.0, %v2370
    %v2372 = vmul.f32 %v2316, %v2357
    %v2373 = vmul.f32 %v2317, %v2359
    %v2374 = vmul.f32 %v2318, %v2361
    %v2375 = vmul.f32 %v2319, %v2363
    %v2376 = vmul.f32 %v2320, %v2365
    %v2377 = vmul.f32 %v2321, %v2367
    %v2378 = vmul.f32 %v2322, %v2369
    %v2379 = vmul.f32 %v2323, %v2371
    %v2380 = vld [vmem:[%s11] sm:$0xff]
    %v2381 = vld [vmem:[%s11 + $0x8] sm:$0xff]
    %v2382 = vld [vmem:[%s11 + $0x10] sm:$0xff]
    %v2383 = vld [vmem:[%s11 + $0x18] sm:$0xff]
    %v2384 = vld [vmem:[%s11 + $0x20] sm:$0xff]
    %v2385 = vld [vmem:[%s11 + $0x28] sm:$0xff]
    %v2386 = vld [vmem:[%s11 + $0x30] sm:$0xff]
    %v2387 = vld [vmem:[%s11 + $0x38] sm:$0xff]
    %2388 = vrot.lane.b32.xlu0 %v2372, 1
    %v2389 = vpop.permute.xlu0 %2388
    %2390 = vrot.lane.b32.xlu0 %v2373, 1
    %v2391 = vpop.permute.xlu0 %2390
    %2392 = vrot.lane.b32.xlu0 %v2374, 1
    %v2393 = vpop.permute.xlu0 %2392
    %2394 = vrot.lane.b32.xlu0 %v2375, 1
    %v2395 = vpop.permute.xlu0 %2394
    %2396 = vrot.lane.b32.xlu0 %v2376, 1
    %v2397 = vpop.permute.xlu0 %2396
    %2398 = vrot.lane.b32.xlu0 %v2377, 1
    %v2399 = vpop.permute.xlu0 %2398
    %2400 = vrot.lane.b32.xlu0 %v2378, 1
    %v2401 = vpop.permute.xlu0 %2400
    %2402 = vrot.lane.b32.xlu0 %v2379, 1
    %v2403 = vpop.permute.xlu0 %2402
    %v2404 = vsel %vm213, 0.0, %v2389
    %v2405 = vsel %vm213, 0.0, %v2391
    %v2406 = vsel %vm213, 0.0, %v2393
    %v2407 = vsel %vm213, 0.0, %v2395
    %v2408 = vsel %vm213, 0.0, %v2397
    %v2409 = vsel %vm213, 0.0, %v2399
    %v2410 = vsel %vm213, 0.0, %v2401
    %v2411 = vsel %vm213, 0.0, %v2403
    %2412 = vrot.lane.b32.xlu0 %v2372, 127
    %v2413 = vpop.permute.xlu0 %2412
    %2414 = vrot.lane.b32.xlu0 %v2373, 127
    %v2415 = vpop.permute.xlu0 %2414
    %2416 = vrot.lane.b32.xlu0 %v2374, 127
    %v2417 = vpop.permute.xlu0 %2416
    %2418 = vrot.lane.b32.xlu0 %v2375, 127
    %v2419 = vpop.permute.xlu0 %2418
    %2420 = vrot.lane.b32.xlu0 %v2376, 127
    %v2421 = vpop.permute.xlu0 %2420
    %2422 = vrot.lane.b32.xlu0 %v2377, 127
    %v2423 = vpop.permute.xlu0 %2422
    %2424 = vrot.lane.b32.xlu0 %v2378, 127
    %v2425 = vpop.permute.xlu0 %2424
    %2426 = vrot.lane.b32.xlu0 %v2379, 127
    %v2427 = vpop.permute.xlu0 %2426
    %v2428 = vsel %vm227, 0.0, %v2413
    %v2429 = vsel %vm227, 0.0, %v2415
    %v2430 = vsel %vm227, 0.0, %v2417
    %v2431 = vsel %vm227, 0.0, %v2419
    %v2432 = vsel %vm227, 0.0, %v2421
    %v2433 = vsel %vm227, 0.0, %v2423
    %v2434 = vsel %vm227, 0.0, %v2425
    %v2435 = vsel %vm227, 0.0, %v2427
    %v2436 = vld [vmem:[%s10] sm:$0xff]
    %v2437 = vld [vmem:[%s10 + $0x8] sm:$0xff]
    %v2438 = vld [vmem:[%s10 + $0x10] sm:$0xff]
    %v2439 = vld [vmem:[%s10 + $0x18] sm:$0xff]
    %v2440 = vld [vmem:[%s10 + $0x20] sm:$0xff]
    %v2441 = vld [vmem:[%s10 + $0x28] sm:$0xff]
    %v2442 = vld [vmem:[%s10 + $0x30] sm:$0xff]
    %v2443 = vld [vmem:[%s10 + $0x38] sm:$0xff]
    %v2444 = vld [vmem:[%s10 + $0x40] sm:$0xff]
    %v2445 = vld [vmem:[%s10 + $0x48] sm:$0xff]
    %v2446 = vld [vmem:[%s10 + $0x50] sm:$0xff]
    %v2447 = vld [vmem:[%s10 + $0x58] sm:$0xff]
    %v2448 = vld [vmem:[%s10 + $0x60] sm:$0xff]
    %v2449 = vld [vmem:[%s10 + $0x68] sm:$0xff]
    %v2450 = vld [vmem:[%s10 + $0x70] sm:$0xff]
    %v2451 = vld [vmem:[%s10 + $0x78] sm:$0xff]
    %2453 = vset.pattern.permute.xlu0 0
    %2454 = vperm.xlu0 %2453, %v2380
    %v2455 = vpop.permute.xlu0 %2454
    %2458 = vset.pattern.permute.xlu0 0
    %2459 = vperm.xlu0 %2458, %v2381
    %v2460 = vpop.permute.xlu0 %2459
    %2463 = vset.pattern.permute.xlu0 0
    %2464 = vperm.xlu0 %2463, %v2382
    %v2465 = vpop.permute.xlu0 %2464
    %2468 = vset.pattern.permute.xlu0 0
    %2469 = vperm.xlu0 %2468, %v2383
    %v2470 = vpop.permute.xlu0 %2469
    %2473 = vset.pattern.permute.xlu0 0
    %2474 = vperm.xlu0 %2473, %v2384
    %v2475 = vpop.permute.xlu0 %2474
    %2478 = vset.pattern.permute.xlu0 0
    %2479 = vperm.xlu0 %2478, %v2385
    %v2480 = vpop.permute.xlu0 %2479
    %2483 = vset.pattern.permute.xlu0 0
    %2484 = vperm.xlu0 %2483, %v2386
    %v2485 = vpop.permute.xlu0 %2484
    %2488 = vset.pattern.permute.xlu0 0
    %2489 = vperm.xlu0 %2488, %v2387
    %v2490 = vpop.permute.xlu0 %2489
    %v2493 = vsel %vm539, %v2437, 0
    %v2496 = vsel %vm539, %v2439, 0
    %v2499 = vsel %vm539, %v2441, 0
    %v2502 = vsel %vm539, %v2443, 0
    %v2505 = vsel %vm539, %v2445, 0
    %v2508 = vsel %vm539, %v2447, 0
    %v2511 = vsel %vm539, %v2449, 0
    %v2514 = vsel %vm539, %v2451, 0
    %2516 = vmatprep.subr.mxu0 0.0
    %2517 = vmatpush1.msra.mxu0 %v2404
    %2518 = vmatprep.subr.mxu0 0.0
    %2519 = vmatpush1.msra.mxu0 %v2405
    %2520 = vmatprep.subr.mxu0 0.0
    %2521 = vmatpush1.msra.mxu0 %v2406
    %2522 = vmatprep.subr.mxu0 0.0
    %2523 = vmatpush1.msra.mxu0 %v2407
    %2524 = vmatprep.subr.mxu0 0.0
    %2525 = vmatpush1.msra.mxu0 %v2408
    %2526 = vmatprep.subr.mxu0 0.0
    %2527 = vmatpush1.msra.mxu0 %v2409
    %2528 = vmatprep.subr.mxu0 0.0
    %2529 = vmatpush1.msra.mxu0 %v2410
    %2530 = vmatprep.subr.mxu0 0.0
    %2531 = vmatpush1.msra.mxu0 %v2411
    %2532 = vmatprep.subr.mxu0 0.0
    %2533 = vmatpush1.msra.mxu0 %v2372
    %2534 = vmatprep.subr.mxu0 0.0
    %2535 = vmatpush1.msra.mxu0 %v2373
    %2536 = vmatprep.subr.mxu0 0.0
    %2537 = vmatpush1.msra.mxu0 %v2374
    %2538 = vmatprep.subr.mxu0 0.0
    %2539 = vmatpush1.msra.mxu0 %v2375
    %2540 = vmatprep.subr.mxu0 0.0
    %2541 = vmatpush1.msra.mxu0 %v2376
    %2542 = vmatprep.subr.mxu0 0.0
    %2543 = vmatpush1.msra.mxu0 %v2377
    %2544 = vmatprep.subr.mxu0 0.0
    %2545 = vmatpush1.msra.mxu0 %v2378
    %2546 = vmatprep.subr.mxu0 0.0
    %2547 = vmatpush1.msra.mxu0 %v2379
    %2548 = vmatprep.subr.mxu0 0.0
    %2549 = vmatpush1.msra.mxu0 %v2428
    %2550 = vmatprep.subr.mxu0 0.0
    %2551 = vmatpush1.msra.mxu0 %v2429
    %2552 = vmatprep.subr.mxu0 0.0
    %2553 = vmatpush1.msra.mxu0 %v2430
    %2554 = vmatprep.subr.mxu0 0.0
    %2555 = vmatpush1.msra.mxu0 %v2431
    %2556 = vmatprep.subr.mxu0 0.0
    %2557 = vmatpush1.msra.mxu0 %v2432
    %2558 = vmatprep.subr.mxu0 0.0
    %2559 = vmatpush1.msra.mxu0 %v2433
    %2560 = vmatprep.subr.mxu0 0.0
    %2561 = vmatpush1.msra.mxu0 %v2434
    %2562 = vmatprep.subr.mxu0 0.0
    %2563 = vmatpush1.msra.mxu0 %v2435
    %2564 = vmatprep.subr.mxu0 0.0
    %2565 = vmatpush1.msra.mxu0 0.0
    %2566 = vmatprep.subr.mxu0 0.0
    %2567 = vmatpush1.msra.mxu0 0.0
    %2568 = vmatprep.subr.mxu0 0.0
    %2569 = vmatpush1.msra.mxu0 0.0
    %2570 = vmatprep.subr.mxu0 0.0
    %2571 = vmatpush1.msra.mxu0 0.0
    %2572 = vmatprep.subr.mxu0 0.0
    %2573 = vmatpush1.msra.mxu0 0.0
    %2574 = vmatprep.subr.mxu0 0.0
    %2575 = vmatpush1.msra.mxu0 0.0
    %2576 = vmatprep.subr.mxu0 0.0
    %2577 = vmatpush1.msra.mxu0 0.0
    %2578 = vmatprep.subr.mxu0 0.0
    %2579 = vmatpush1.msra.mxu0 0.0
    %2580 = vmatprep.mubr.f32.mxu0 %v2493
    %2581 = vmatmul.mubr.f32.gmra.mrb[0].mxu0 %v2436
    %v2582 = vpop.f32.mrb[0].mxu0
    %v2583 = vadd.f32 %v2455, %v2582
    %v2584 = vpop.f32.mrb[0].mxu0
    %2585 = vmatprep.mubr.f32.mxu0 %v2496
    %2586 = vmatmul.mubr.f32.gmra.mrb[0].mxu0 %v2438
    %v2587 = vpop.f32.mrb[0].mxu0
    %v2588 = vadd.f32 %v2460, %v2587
    %v2589 = vpop.f32.mrb[0].mxu0
    %2590 = vmatprep.mubr.f32.mxu0 %v2499
    %2591 = vmatmul.mubr.f32.gmra.mrb[0].mxu0 %v2440
    %v2592 = vpop.f32.mrb[0].mxu0
    %v2593 = vadd.f32 %v2465, %v2592
    %v2594 = vpop.f32.mrb[0].mxu0
    %2595 = vmatprep.mubr.f32.mxu0 %v2502
    %2596 = vmatmul.mubr.f32.gmra.mrb[0].mxu0 %v2442
    %v2597 = vpop.f32.mrb[0].mxu0
    %v2598 = vadd.f32 %v2470, %v2597
    %v2599 = vpop.f32.mrb[0].mxu0
    %2600 = vmatprep.mubr.f32.mxu0 %v2505
    %2601 = vmatmul.mubr.f32.gmra.mrb[0].mxu0 %v2444
    %v2602 = vpop.f32.mrb[0].mxu0
    %v2603 = vadd.f32 %v2475, %v2602
    %v2604 = vpop.f32.mrb[0].mxu0
    %2605 = vmatprep.mubr.f32.mxu0 %v2508
    %2606 = vmatmul.mubr.f32.gmra.mrb[0].mxu0 %v2446
    %v2607 = vpop.f32.mrb[0].mxu0
    %v2608 = vadd.f32 %v2480, %v2607
    %v2609 = vpop.f32.mrb[0].mxu0
    %2610 = vmatprep.mubr.f32.mxu0 %v2511
    %2611 = vmatmul.mubr.f32.gmra.mrb[0].mxu0 %v2448
    %v2612 = vpop.f32.mrb[0].mxu0
    %v2613 = vadd.f32 %v2485, %v2612
    %v2614 = vpop.f32.mrb[0].mxu0
    %2615 = vmatprep.mubr.f32.mxu0 %v2514
    %2616 = vmatmul.mubr.f32.gmra.mrb[0].mxu0 %v2450
    %v2617 = vpop.f32.mrb[0].mxu0
    %v2618 = vadd.f32 %v2490, %v2617
    %v2619 = vpop.f32.mrb[0].mxu0
    %2620 = vdwg.mxu0
    %v2621 = vld [vmem:[%s12] sm:$0xff]
    %v2622 = vld [vmem:[%s12 + $0x8] sm:$0xff]
    %v2623 = vld [vmem:[%s12 + $0x10] sm:$0xff]
    %v2624 = vld [vmem:[%s12 + $0x18] sm:$0xff]
    %v2625 = vld [vmem:[%s12 + $0x20] sm:$0xff]
    %v2626 = vld [vmem:[%s12 + $0x28] sm:$0xff]
    %v2627 = vld [vmem:[%s12 + $0x30] sm:$0xff]
    %v2628 = vld [vmem:[%s12 + $0x38] sm:$0xff]
    %v2629 = vld [vmem:[%s13] sm:$0xff]
    %v2630 = vld [vmem:[%s13 + $0x8] sm:$0xff]
    %v2631 = vld [vmem:[%s13 + $0x10] sm:$0xff]
    %v2632 = vld [vmem:[%s13 + $0x18] sm:$0xff]
    %v2633 = vld [vmem:[%s13 + $0x20] sm:$0xff]
    %v2634 = vld [vmem:[%s13 + $0x28] sm:$0xff]
    %v2635 = vld [vmem:[%s13 + $0x30] sm:$0xff]
    %v2636 = vld [vmem:[%s13 + $0x38] sm:$0xff]
    %2638 = vset.pattern.permute.xlu0 0
    %2639 = vperm.xlu0 %2638, %v2629
    %v2640 = vpop.permute.xlu0 %2639
    %2643 = vset.pattern.permute.xlu0 0
    %2644 = vperm.xlu0 %2643, %v2630
    %v2645 = vpop.permute.xlu0 %2644
    %2648 = vset.pattern.permute.xlu0 0
    %2649 = vperm.xlu0 %2648, %v2631
    %v2650 = vpop.permute.xlu0 %2649
    %2653 = vset.pattern.permute.xlu0 0
    %2654 = vperm.xlu0 %2653, %v2632
    %v2655 = vpop.permute.xlu0 %2654
    %2658 = vset.pattern.permute.xlu0 0
    %2659 = vperm.xlu0 %2658, %v2633
    %v2660 = vpop.permute.xlu0 %2659
    %2663 = vset.pattern.permute.xlu0 0
    %2664 = vperm.xlu0 %2663, %v2634
    %v2665 = vpop.permute.xlu0 %2664
    %2668 = vset.pattern.permute.xlu0 0
    %2669 = vperm.xlu0 %2668, %v2635
    %v2670 = vpop.permute.xlu0 %2669
    %2673 = vset.pattern.permute.xlu0 0
    %2674 = vperm.xlu0 %2673, %v2636
    %v2675 = vpop.permute.xlu0 %2674
    %v2678 = vsel %vm1294, %v2621, 0
    %v2681 = vsel %vm1294, %v2622, 0
    %v2684 = vsel %vm1294, %v2623, 0
    %v2687 = vsel %vm1294, %v2624, 0
    %v2690 = vsel %vm1294, %v2625, 0
    %v2693 = vsel %vm1294, %v2626, 0
    %v2696 = vsel %vm1294, %v2627, 0
    %v2699 = vsel %vm1294, %v2628, 0
    %2701 = vmatprep.subr.mxu0 0.0
    %2702 = vmatpush1.msra.mxu0 %v1441
    %2703 = vmatprep.subr.mxu0 0.0
    %2704 = vmatpush1.msra.mxu0 %v1442
    %2705 = vmatprep.subr.mxu0 0.0
    %2706 = vmatpush1.msra.mxu0 %v1443
    %2707 = vmatprep.subr.mxu0 0.0
    %2708 = vmatpush1.msra.mxu0 %v1444
    %2709 = vmatprep.subr.mxu0 0.0
    %2710 = vmatpush1.msra.mxu0 0.0
    %2711 = vmatprep.subr.mxu0 0.0
    %2712 = vmatpush1.msra.mxu0 0.0
    %2713 = vmatprep.subr.mxu0 0.0
    %2714 = vmatpush1.msra.mxu0 0.0
    %2715 = vmatprep.subr.mxu0 0.0
    %2716 = vmatpush1.msra.mxu0 0.0
    %2717 = vmatprep.subr.mxu0 0.0
    %2718 = vmatpush1.msra.mxu0 0.0
    %2719 = vmatprep.subr.mxu0 0.0
    %2720 = vmatpush1.msra.mxu0 0.0
    %2721 = vmatprep.subr.mxu0 0.0
    %2722 = vmatpush1.msra.mxu0 0.0
    %2723 = vmatprep.subr.mxu0 0.0
    %2724 = vmatpush1.msra.mxu0 0.0
    %2725 = vmatprep.subr.mxu0 0.0
    %2726 = vmatpush1.msra.mxu0 0.0
    %2727 = vmatprep.subr.mxu0 0.0
    %2728 = vmatpush1.msra.mxu0 0.0
    %2729 = vmatprep.subr.mxu0 0.0
    %2730 = vmatpush1.msra.mxu0 0.0
    %2731 = vmatprep.subr.mxu0 0.0
    %2732 = vmatpush1.msra.mxu0 0.0
    %2733 = vmatprep.subr.mxu0 0.0
    %2734 = vmatpush1.msra.mxu0 0.0
    %2735 = vmatprep.subr.mxu0 0.0
    %2736 = vmatpush1.msra.mxu0 0.0
    %2737 = vmatprep.subr.mxu0 0.0
    %2738 = vmatpush1.msra.mxu0 0.0
    %2739 = vmatprep.subr.mxu0 0.0
    %2740 = vmatpush1.msra.mxu0 0.0
    %2741 = vmatprep.subr.mxu0 0.0
    %2742 = vmatpush1.msra.mxu0 0.0
    %2743 = vmatprep.subr.mxu0 0.0
    %2744 = vmatpush1.msra.mxu0 0.0
    %2745 = vmatprep.subr.mxu0 0.0
    %2746 = vmatpush1.msra.mxu0 0.0
    %2747 = vmatprep.subr.mxu0 0.0
    %2748 = vmatpush1.msra.mxu0 0.0
    %2749 = vmatprep.subr.mxu0 0.0
    %2750 = vmatpush1.msra.mxu0 0.0
    %2751 = vmatprep.subr.mxu0 0.0
    %2752 = vmatpush1.msra.mxu0 0.0
    %2753 = vmatprep.subr.mxu0 0.0
    %2754 = vmatpush1.msra.mxu0 0.0
    %2755 = vmatprep.subr.mxu0 0.0
    %2756 = vmatpush1.msra.mxu0 0.0
    %2757 = vmatprep.subr.mxu0 0.0
    %2758 = vmatpush1.msra.mxu0 0.0
    %2759 = vmatprep.subr.mxu0 0.0
    %2760 = vmatpush1.msra.mxu0 0.0
    %2761 = vmatprep.subr.mxu0 0.0
    %2762 = vmatpush1.msra.mxu0 0.0
    %2763 = vmatprep.subr.mxu0 0.0
    %2764 = vmatpush1.msra.mxu0 0.0
    %2765 = vmatprep.mubr.f32.mxu0 0.0
    %2766 = vmatmul.mubr.f32.gmra.mrb[0].mxu0 %v2678
    %v2767 = vpop.f32.mrb[0].mxu0
    %v2768 = vadd.f32 %v2640, %v2767
    %v2769 = vpop.f32.mrb[0].mxu0
    %2770 = vmatprep.mubr.f32.mxu0 0.0
    %2771 = vmatmul.mubr.f32.gmra.mrb[0].mxu0 %v2681
    %v2772 = vpop.f32.mrb[0].mxu0
    %v2773 = vadd.f32 %v2645, %v2772
    %v2774 = vpop.f32.mrb[0].mxu0
    %2775 = vmatprep.mubr.f32.mxu0 0.0
    %2776 = vmatmul.mubr.f32.gmra.mrb[0].mxu0 %v2684
    %v2777 = vpop.f32.mrb[0].mxu0
    %v2778 = vadd.f32 %v2650, %v2777
    %v2779 = vpop.f32.mrb[0].mxu0
    %2780 = vmatprep.mubr.f32.mxu0 0.0
    %2781 = vmatmul.mubr.f32.gmra.mrb[0].mxu0 %v2687
    %v2782 = vpop.f32.mrb[0].mxu0
    %v2783 = vadd.f32 %v2655, %v2782
    %v2784 = vpop.f32.mrb[0].mxu0
    %2785 = vmatprep.mubr.f32.mxu0 0.0
    %2786 = vmatmul.mubr.f32.gmra.mrb[0].mxu0 %v2690
    %v2787 = vpop.f32.mrb[0].mxu0
    %v2788 = vadd.f32 %v2660, %v2787
    %v2789 = vpop.f32.mrb[0].mxu0
    %2790 = vmatprep.mubr.f32.mxu0 0.0
    %2791 = vmatmul.mubr.f32.gmra.mrb[0].mxu0 %v2693
    %v2792 = vpop.f32.mrb[0].mxu0
    %v2793 = vadd.f32 %v2665, %v2792
    %v2794 = vpop.f32.mrb[0].mxu0
    %2795 = vmatprep.mubr.f32.mxu0 0.0
    %2796 = vmatmul.mubr.f32.gmra.mrb[0].mxu0 %v2696
    %v2797 = vpop.f32.mrb[0].mxu0
    %v2798 = vadd.f32 %v2670, %v2797
    %v2799 = vpop.f32.mrb[0].mxu0
    %2800 = vmatprep.mubr.f32.mxu0 0.0
    %2801 = vmatmul.mubr.f32.gmra.mrb[0].mxu0 %v2699
    %v2802 = vpop.f32.mrb[0].mxu0
    %v2803 = vadd.f32 %v2675, %v2802
    %v2804 = vpop.f32.mrb[0].mxu0
    %2805 = vdwg.mxu0
    %v2806 = vadd.f32 %v2768, %v2583
    %v2807 = vadd.f32 %v2773, %v2588
    %v2808 = vadd.f32 %v2778, %v2593
    %v2809 = vadd.f32 %v2783, %v2598
    %v2810 = vadd.f32 %v2788, %v2603
    %v2811 = vadd.f32 %v2793, %v2608
    %v2812 = vadd.f32 %v2798, %v2613
    %v2813 = vadd.f32 %v2803, %v2618
    %s2814 = scalar_lea.vmem [#allocation2], 64
    %2815 = vst [vmem:[%s2814] sm:$0xff] %v2806
    %2816 = vst [vmem:[%s2814 + $0x8] sm:$0xff] %v2807
    %2817 = vst [vmem:[%s2814 + $0x10] sm:$0xff] %v2808
    %2818 = vst [vmem:[%s2814 + $0x18] sm:$0xff] %v2809
    %2819 = vst [vmem:[%s2814 + $0x20] sm:$0xff] %v2810
    %2820 = vst [vmem:[%s2814 + $0x28] sm:$0xff] %v2811
    %2821 = vst [vmem:[%s2814 + $0x30] sm:$0xff] %v2812
    %2822 = vst [vmem:[%s2814 + $0x38] sm:$0xff] %v2813
    // Predicated region
    $region58: #{tpu_custom_call.1} parent=1 // pred_check
      _
    $region59: #{tpu_custom_call.1} parent=1 // pred_check_branch
      %2824 = sbr.rel (0) target = $region61
    $region60: #{tpu_custom_call.1} parent=1 // pred_region
      %s2826 = ssub.s32 2048, 2048
      %2827 = vsyncadd [#allocation3], %s2826
      %s2828 = sshll.u32 [#allocation2], 4
      %s2829 = int_to_ptr.vmem [resolvable:$true] %s2828
      %2834 = dma.vmem_to_hbm [thread:$0]  %s2829, 2048, %s14, [#allocation3], 128, 128, 8
    $region61: #{tpu_custom_call.1} parent=1 // pred_fallthru
      _
    // Predicated region
    $region62: #{tpu_custom_call.1} parent=1 // pred_check
      _
    $region63: #{tpu_custom_call.1} parent=1 // pred_check_branch
      %2836 = sbr.rel (0) target = $region65
    $region64: #{tpu_custom_call.1} parent=1 // pred_region
      %2837 = dma.done [#allocation3], 2048
    $region65: #{tpu_custom_call.1} parent=1 // pred_fallthru
      _
    %2838 = vsyncpa [#allocation3], 1

</llo_original>
